<compile_context>
chip_gen: v7x
topology: tpu7x:2x2x1
jax: 0.10.0
libtpu: 0.0.40
codegen_flags: <defaults>
</compile_context>

<pallas_src>
import math
import functools

import jax
import jax.numpy as jnp
from jax.experimental import pallas as pl
from jax.experimental.pallas import tpu as pltpu

_INV_SQRT2 = 1.0 / math.sqrt(2.0)


def _erf_f32(x):
    # Abramowitz & Stegun 7.1.26 polynomial erf (|abs err| <= 1.5e-7), built from ops
    # with guaranteed Mosaic lowerings.  The divide goes through the EUP via
    # pl.reciprocal(approx=True) (same unit as the exp), keeping the VALU slot free.
    a1, a2, a3, a4, a5 = (0.254829592, -0.284496736, 1.421413741,
                          -1.453152027, 1.061405429)
    p = 0.3275911
    s = jnp.where(x >= 0.0, 1.0, -1.0)
    z = jnp.abs(x)
    t = pl.reciprocal(1.0 + p * z, approx=True)
    poly = ((((a5 * t + a4) * t + a3) * t + a2) * t + a1) * t
    return s * (1.0 - poly * jnp.exp(-z * z))


def _gelu_exact_f32(x):
    # nn.GELU() default (approximate='none'): 0.5 * x * (1 + erf(x / sqrt(2))).
    return 0.5 * x * (1.0 + _erf_f32(x * _INV_SQRT2))


def mlp_kernel(x_ref, w_fc_ref, w_proj_ref, o_ref, acc_ref, *, n_sub):
    """acc += gelu(x_tile @ W_fc[:, j_tile]) @ W_proj[j_tile, :]  (fp32 accumulate)."""
    j = pl.program_id(1)

    @pl.when(j == 0)
    def _():
        acc_ref[...] = jnp.zeros_like(acc_ref)

    bh = w_fc_ref.shape[1]
    sub = bh // n_sub
    x = x_ref[...]
    # Static unroll over sub-chunks: dot1 of chunk s+1 can issue while GELU/dot2 of
    # chunk s are still draining, removing the MXU bubble behind the VPU/EUP.
    for s in range(n_sub):
        lo, hi = s * sub, (s + 1) * sub
        h = jnp.dot(x, w_fc_ref[:, lo:hi], preferred_element_type=jnp.float32)
        h = _gelu_exact_f32(h)
        acc_ref[...] += jnp.dot(h.astype(w_proj_ref.dtype), w_proj_ref[lo:hi, :],
                                preferred_element_type=jnp.float32)

    @pl.when(j == pl.num_programs(1) - 1)
    def _():
        o_ref[...] = acc_ref[...].astype(o_ref.dtype)


def _chip_tiling_defaults():
    """Per-generation (block_m, block_h, vmem_limit_bytes, want_two_row_tiles)."""
    kind = ""
    try:
        kind = jax.devices()[0].device_kind.lower()
    except Exception:
        pass
    if "v7" in kind:
        # 64 MiB VMEM per TC; 2 TCs share the parallel grid axis.
        return 320, 256, 56 * 1024 * 1024, True
    if "v5" in kind:
        # v5e: 128 MiB VMEM (16 MiB default scoped); compute-bound from bm ~ 256.
        return 256, 512, 96 * 1024 * 1024, False
    # v6e and unknown chips: 128 MiB VMEM; compute-bound from bm ~ 384-512.
    return 512, 512, 100 * 1024 * 1024, False


def _round_up(x, m):
    return (x + m - 1) // m * m


def mlp_pallas(x, w_fc, w_proj, *, block_m=None, block_h=None, vmem_limit_bytes=None):
    """x: (..., E); w_fc: (E, 4E) pre-transposed; w_proj: (4E, E) pre-transposed."""
    *lead, E = x.shape
    H = w_fc.shape[1]
    assert w_fc.shape == (E, H) and w_proj.shape == (H, E)

    dbm, dbh, dvmem, want_two = _chip_tiling_defaults()
    block_m = dbm if block_m is None else block_m
    block_h = dbh if block_h is None else block_h
    vmem_limit_bytes = dvmem if vmem_limit_bytes is None else vmem_limit_bytes

    M = math.prod(lead) if lead else 1
    x2 = x.reshape(M, E)

    # Sublane granularity by dtype: 8 for 4-byte, 16 for bf16, 32 for int8/fp8.
    sub_m = max(8, 32 // jnp.dtype(x.dtype).itemsize)

    m_ceil = _round_up(M, sub_m)
    bm = min(_round_up(block_m, sub_m), m_ceil)
    if want_two and m_ceil // bm < 2 and m_ceil >= 2 * sub_m:
        # Keep both v7x TensorCores busy: at least two tiles on the parallel axis.
        bm = _round_up(-(-m_ceil // 2), sub_m)

    M_pad = _round_up(M, bm)
    if M_pad != M:
        # Zero rows: gelu(0) = 0 -> zero contribution; sliced off after the call.
        x2 = jnp.pad(x2, ((0, M_pad - M), (0, 0)))

    # Hidden tile: a multiple of 128 that divides H (fallback: full H).
    bh = min(block_h, H)
    if H % bh != 0:
        bh128 = (bh // 128) * 128
        bh = next((d for d in range(bh128, 0, -128) if H % d == 0), H)
    n_sub = 2 if (bh >= 256 and bh % 256 == 0) else 1

    grid = (M_pad // bm, H // bh)
    kernel = functools.partial(mlp_kernel, n_sub=n_sub)

    def run(single_buffer_x):
        x_kwargs = dict(pipeline_mode=pl.Buffered(1)) if single_buffer_x else {}
        return pl.pallas_call(
            kernel,
            out_shape=jax.ShapeDtypeStruct((M_pad, E), x.dtype),
            grid_spec=pltpu.PrefetchScalarGridSpec(
                num_scalar_prefetch=0,
                grid=grid,
                in_specs=[
                    # x tile index is constant along j -> single buffer is enough.
                    pl.BlockSpec((bm, E), lambda i, j: (i, 0), **x_kwargs),
                    pl.BlockSpec((E, bh), lambda i, j: (0, j)),   # W_fc column block
                    pl.BlockSpec((bh, E), lambda i, j: (j, 0)),   # W_proj row block
                ],
                out_specs=pl.BlockSpec((bm, E), lambda i, j: (i, 0)),
                scratch_shapes=[pltpu.VMEM((bm, E), jnp.float32)],
            ),
            compiler_params=pltpu.CompilerParams(
                dimension_semantics=("parallel", "arbitrary"),
                vmem_limit_bytes=vmem_limit_bytes,
            ),
        )(x2, w_fc, w_proj)

    try:
        out = run(single_buffer_x=True)
    except Exception:
        # Fallback if pipeline_mode=pl.Buffered(1) is unsupported in this JAX build.
        out = run(single_buffer_x=False)

    if M_pad != M:
        out = out[:M]
    return out.reshape(*lead, E)


def reference_mlp(x, w_fc, w_proj):
    """Pure-JAX fp32 reference (mirrors MLP.forward with bias=False, dropout=0)."""
    h = jnp.einsum("...e,eh->...h", x.astype(jnp.float32), w_fc.astype(jnp.float32))
    h = 0.5 * h * (1.0 + jax.scipy.special.erf(h * _INV_SQRT2))
    return jnp.einsum("...h,he->...e", h, w_proj.astype(jnp.float32))


if __name__ == "__main__":
    # Toy GPTConfig-like shapes: n_head=4, n_embd=32 -> E = n_head*n_embd = 128
    # (lane-dense output), hidden 4E = 512, batch 2, seq 16.
    n_head, n_embd = 4, 32
    E = n_head * n_embd
    H = 4 * E
    B, T = 2, 16

    key = jax.random.PRNGKey(0)
    kx, k1, k2 = jax.random.split(key, 3)
    x = jax.random.normal(kx, (B, T, E), jnp.float32)

    # PyTorch nn.Linear stores weight as (out_features, in_features); pre-transpose on
    # the host so the kernel issues plain x @ W (no in-kernel transposes).
    w_fc = (jax.random.normal(k1, (H, E), jnp.float32) * 0.05).T    # (E, H)
    w_proj = (jax.random.normal(k2, (E, H), jnp.float32) * 0.05).T  # (H, E)

    ref = reference_mlp(x, w_fc, w_proj)

    # fp32 path (approx-reciprocal in erf -> slightly looser than exact-divide fp32).
    out = jax.block_until_ready(mlp_pallas(x, w_fc, w_proj))
    assert out.shape == (B, T, E)
    err = float(jnp.max(jnp.abs(out - ref)))
    assert err < 5e-3, f"fp32 mismatch vs reference (max abs err {err:.3e})"

    # bf16 path (production dtype: MXU-native operands, fp32 accumulation in-kernel).
    out_bf16 = jax.block_until_ready(
        mlp_pallas(x.astype(jnp.bfloat16), w_fc.astype(jnp.bfloat16),
                   w_proj.astype(jnp.bfloat16)))
    err_bf16 = float(jnp.max(jnp.abs(out_bf16.astype(jnp.float32) - ref)))
    assert err_bf16 < 5e-2, f"bf16 mismatch vs reference (max abs err {err_bf16:.3e})"

    print("KERNEL_OK")
</pallas_src>

<mosaic_0001>
module attributes {stable_mosaic.version = 11 : i64} {
  func.func @mlp_kernel(%arg0: i32, %arg1: i32, %arg2: memref<32x128xf32, #tpu.memory_space<vmem>>, %arg3: memref<128x512xf32, #tpu.memory_space<vmem>>, %arg4: memref<512x128xf32, #tpu.memory_space<vmem>>, %arg5: memref<32x128xf32, #tpu.memory_space<vmem>>, %arg6: memref<32x128xf32, #tpu.memory_space<vmem>>) attributes {dimension_semantics = [#tpu.dimension_semantics<parallel>, #tpu.dimension_semantics<arbitrary>], iteration_bounds = array<i64: 1, 1>, scalar_prefetch = 0 : i64, scratch_operands = 1 : i64, tpu.core_type = #tpu.core_type<tc>, window_params = [{pipeline_mode = #tpu.pipeline_mode<synchronous>, transform_indices = @transform_0, window_bounds = array<i64: 32, 128>}, {transform_indices = @transform_1, window_bounds = array<i64: 128, 512>}, {transform_indices = @transform_2, window_bounds = array<i64: 512, 128>}, {transform_indices = @transform_3, window_bounds = array<i64: 32, 128>}]} {
    %c0_i32 = arith.constant 0 : i32
    %0 = arith.cmpi eq, %arg1, %c0_i32 : i32
    %1 = arith.extui %0 : i1 to i32
    %c0_i32_0 = arith.constant 0 : i32
    %2 = arith.cmpi ne, %1, %c0_i32_0 : i32
    scf.if %2 {
      %cst_52 = arith.constant 0.000000e+00 : f32
      %101 = vector.broadcast %cst_52 : f32 to vector<32x128xf32>
      %c0_53 = arith.constant 0 : index
      %c0_54 = arith.constant 0 : index
      %102 = vector.load %arg6[%c0_53, %c0_54] : memref<32x128xf32, #tpu.memory_space<vmem>>, vector<32x128xf32>
      tpu.vector_store %arg6[%c0_53, %c0_54], %101 {strides = array<i32>} : memref<32x128xf32, #tpu.memory_space<vmem>>, vector<32x128xf32>,
    } else {
    }
    %c0 = arith.constant 0 : index
    %c0_1 = arith.constant 0 : index
    %3 = vector.load %arg2[%c0, %c0_1] : memref<32x128xf32, #tpu.memory_space<vmem>>, vector<32x128xf32>
    %c0_2 = arith.constant 0 : index
    %c0_3 = arith.constant 0 : index
    %4 = vector.load %arg3[%c0_2, %c0_3] : memref<128x512xf32, #tpu.memory_space<vmem>>, vector<128x256xf32>
    %cst = arith.constant dense<0.000000e+00> : vector<32x256xf32>
    %5 = tpu.matmul %3, %4, %cst {dimension_numbers = #tpu.dot_dimension_numbers<[1], [0], [0], [1], [0, 0, 1, 1], [], []>} : vector<32x128xf32>, vector<128x256xf32>, vector<32x256xf32> -> vector<32x256xf32>
    %cst_4 = arith.constant 5.000000e-01 : f32
    %6 = vector.broadcast %cst_4 : f32 to vector<32x256xf32>
    %7 = arith.mulf %6, %5 : vector<32x256xf32>
    %cst_5 = arith.constant 0.707106769 : f32
    %8 = vector.broadcast %cst_5 : f32 to vector<32x256xf32>
    %9 = arith.mulf %5, %8 : vector<32x256xf32>
    %cst_6 = arith.constant 0.000000e+00 : f32
    %10 = vector.broadcast %cst_6 : f32 to vector<32x256xf32>
    %11 = arith.cmpf oge, %9, %10 : vector<32x256xf32>
    %cst_7 = arith.constant 1.000000e+00 : f32
    %cst_8 = arith.constant -1.000000e+00 : f32
    %12 = vector.broadcast %cst_7 : f32 to vector<32x256xf32>
    %13 = vector.broadcast %cst_8 : f32 to vector<32x256xf32>
    %14 = arith.select %11, %12, %13 : vector<32x256xi1>, vector<32x256xf32>
    %15 = math.absf %9 : vector<32x256xf32>
    %cst_9 = arith.constant 0.327591091 : f32
    %16 = vector.broadcast %cst_9 : f32 to vector<32x256xf32>
    %17 = arith.mulf %16, %15 : vector<32x256xf32>
    %cst_10 = arith.constant 1.000000e+00 : f32
    %18 = vector.broadcast %cst_10 : f32 to vector<32x256xf32>
    %19 = arith.addf %18, %17 : vector<32x256xf32>
    %20 = tpu.reciprocal %19 {approx = true} : vector<32x256xf32> -> vector<32x256xf32>
    %cst_11 = arith.constant 1.06140542 : f32
    %21 = vector.broadcast %cst_11 : f32 to vector<32x256xf32>
    %22 = arith.mulf %21, %20 : vector<32x256xf32>
    %cst_12 = arith.constant -1.45315206 : f32
    %23 = vector.broadcast %cst_12 : f32 to vector<32x256xf32>
    %24 = arith.addf %22, %23 : vector<32x256xf32>
    %25 = arith.mulf %24, %20 : vector<32x256xf32>
    %cst_13 = arith.constant 1.42141378 : f32
    %26 = vector.broadcast %cst_13 : f32 to vector<32x256xf32>
    %27 = arith.addf %25, %26 : vector<32x256xf32>
    %28 = arith.mulf %27, %20 : vector<32x256xf32>
    %cst_14 = arith.constant -0.284496725 : f32
    %29 = vector.broadcast %cst_14 : f32 to vector<32x256xf32>
    %30 = arith.addf %28, %29 : vector<32x256xf32>
    %31 = arith.mulf %30, %20 : vector<32x256xf32>
    %cst_15 = arith.constant 0.254829586 : f32
    %32 = vector.broadcast %cst_15 : f32 to vector<32x256xf32>
    %33 = arith.addf %31, %32 : vector<32x256xf32>
    %34 = arith.mulf %33, %20 : vector<32x256xf32>
    %cst_16 = arith.constant 0.000000e+00 : f32
    %35 = vector.broadcast %cst_16 : f32 to vector<32x256xf32>
    %36 = arith.subf %35, %15 : vector<32x256xf32>
    %37 = arith.mulf %36, %15 : vector<32x256xf32>
    %38 = math.exp %37 : vector<32x256xf32>
    %39 = arith.mulf %34, %38 : vector<32x256xf32>
    %cst_17 = arith.constant 1.000000e+00 : f32
    %40 = vector.broadcast %cst_17 : f32 to vector<32x256xf32>
    %41 = arith.subf %40, %39 : vector<32x256xf32>
    %42 = arith.mulf %14, %41 : vector<32x256xf32>
    %cst_18 = arith.constant 1.000000e+00 : f32
    %43 = vector.broadcast %cst_18 : f32 to vector<32x256xf32>
    %44 = arith.addf %43, %42 : vector<32x256xf32>
    %45 = arith.mulf %7, %44 : vector<32x256xf32>
    %c0_19 = arith.constant 0 : index
    %c0_20 = arith.constant 0 : index
    %46 = vector.load %arg6[%c0_19, %c0_20] : memref<32x128xf32, #tpu.memory_space<vmem>>, vector<32x128xf32>
    %c0_21 = arith.constant 0 : index
    %c0_22 = arith.constant 0 : index
    %47 = vector.load %arg4[%c0_21, %c0_22] : memref<512x128xf32, #tpu.memory_space<vmem>>, vector<256x128xf32>
    %cst_23 = arith.constant dense<0.000000e+00> : vector<32x128xf32>
    %48 = tpu.matmul %45, %47, %cst_23 {dimension_numbers = #tpu.dot_dimension_numbers<[1], [0], [0], [1], [0, 0, 1, 1], [], []>} : vector<32x256xf32>, vector<256x128xf32>, vector<32x128xf32> -> vector<32x128xf32>
    %49 = arith.addf %46, %48 : vector<32x128xf32>
    %c0_24 = arith.constant 0 : index
    %c0_25 = arith.constant 0 : index
    %50 = vector.load %arg6[%c0_24, %c0_25] : memref<32x128xf32, #tpu.memory_space<vmem>>, vector<32x128xf32>
    tpu.vector_store %arg6[%c0_24, %c0_25], %49 {strides = array<i32>} : memref<32x128xf32, #tpu.memory_space<vmem>>, vector<32x128xf32>,
    %c0_26 = arith.constant 0 : index
    %c256 = arith.constant 256 : index
    %51 = vector.load %arg3[%c0_26, %c256] : memref<128x512xf32, #tpu.memory_space<vmem>>, vector<128x256xf32>
    %cst_27 = arith.constant dense<0.000000e+00> : vector<32x256xf32>
    %52 = tpu.matmul %3, %51, %cst_27 {dimension_numbers = #tpu.dot_dimension_numbers<[1], [0], [0], [1], [0, 0, 1, 1], [], []>} : vector<32x128xf32>, vector<128x256xf32>, vector<32x256xf32> -> vector<32x256xf32>
    %cst_28 = arith.constant 5.000000e-01 : f32
    %53 = vector.broadcast %cst_28 : f32 to vector<32x256xf32>
    %54 = arith.mulf %53, %52 : vector<32x256xf32>
    %cst_29 = arith.constant 0.707106769 : f32
    %55 = vector.broadcast %cst_29 : f32 to vector<32x256xf32>
    %56 = arith.mulf %52, %55 : vector<32x256xf32>
    %cst_30 = arith.constant 0.000000e+00 : f32
    %57 = vector.broadcast %cst_30 : f32 to vector<32x256xf32>
    %58 = arith.cmpf oge, %56, %57 : vector<32x256xf32>
    %cst_31 = arith.constant 1.000000e+00 : f32
    %cst_32 = arith.constant -1.000000e+00 : f32
    %59 = vector.broadcast %cst_31 : f32 to vector<32x256xf32>
    %60 = vector.broadcast %cst_32 : f32 to vector<32x256xf32>
    %61 = arith.select %58, %59, %60 : vector<32x256xi1>, vector<32x256xf32>
    %62 = math.absf %56 : vector<32x256xf32>
    %cst_33 = arith.constant 0.327591091 : f32
    %63 = vector.broadcast %cst_33 : f32 to vector<32x256xf32>
    %64 = arith.mulf %63, %62 : vector<32x256xf32>
    %cst_34 = arith.constant 1.000000e+00 : f32
    %65 = vector.broadcast %cst_34 : f32 to vector<32x256xf32>
    %66 = arith.addf %65, %64 : vector<32x256xf32>
    %67 = tpu.reciprocal %66 {approx = true} : vector<32x256xf32> -> vector<32x256xf32>
    %cst_35 = arith.constant 1.06140542 : f32
    %68 = vector.broadcast %cst_35 : f32 to vector<32x256xf32>
    %69 = arith.mulf %68, %67 : vector<32x256xf32>
    %cst_36 = arith.constant -1.45315206 : f32
    %70 = vector.broadcast %cst_36 : f32 to vector<32x256xf32>
    %71 = arith.addf %69, %70 : vector<32x256xf32>
    %72 = arith.mulf %71, %67 : vector<32x256xf32>
    %cst_37 = arith.constant 1.42141378 : f32
    %73 = vector.broadcast %cst_37 : f32 to vector<32x256xf32>
    %74 = arith.addf %72, %73 : vector<32x256xf32>
    %75 = arith.mulf %74, %67 : vector<32x256xf32>
    %cst_38 = arith.constant -0.284496725 : f32
    %76 = vector.broadcast %cst_38 : f32 to vector<32x256xf32>
    %77 = arith.addf %75, %76 : vector<32x256xf32>
    %78 = arith.mulf %77, %67 : vector<32x256xf32>
    %cst_39 = arith.constant 0.254829586 : f32
    %79 = vector.broadcast %cst_39 : f32 to vector<32x256xf32>
    %80 = arith.addf %78, %79 : vector<32x256xf32>
    %81 = arith.mulf %80, %67 : vector<32x256xf32>
    %cst_40 = arith.constant 0.000000e+00 : f32
    %82 = vector.broadcast %cst_40 : f32 to vector<32x256xf32>
    %83 = arith.subf %82, %62 : vector<32x256xf32>
    %84 = arith.mulf %83, %62 : vector<32x256xf32>
    %85 = math.exp %84 : vector<32x256xf32>
    %86 = arith.mulf %81, %85 : vector<32x256xf32>
    %cst_41 = arith.constant 1.000000e+00 : f32
    %87 = vector.broadcast %cst_41 : f32 to vector<32x256xf32>
    %88 = arith.subf %87, %86 : vector<32x256xf32>
    %89 = arith.mulf %61, %88 : vector<32x256xf32>
    %cst_42 = arith.constant 1.000000e+00 : f32
    %90 = vector.broadcast %cst_42 : f32 to vector<32x256xf32>
    %91 = arith.addf %90, %89 : vector<32x256xf32>
    %92 = arith.mulf %54, %91 : vector<32x256xf32>
    %c0_43 = arith.constant 0 : index
    %c0_44 = arith.constant 0 : index
    %93 = vector.load %arg6[%c0_43, %c0_44] : memref<32x128xf32, #tpu.memory_space<vmem>>, vector<32x128xf32>
    %c256_45 = arith.constant 256 : index
    %c0_46 = arith.constant 0 : index
    %94 = vector.load %arg4[%c256_45, %c0_46] : memref<512x128xf32, #tpu.memory_space<vmem>>, vector<256x128xf32>
    %cst_47 = arith.constant dense<0.000000e+00> : vector<32x128xf32>
    %95 = tpu.matmul %92, %94, %cst_47 {dimension_numbers = #tpu.dot_dimension_numbers<[1], [0], [0], [1], [0, 0, 1, 1], [], []>} : vector<32x256xf32>, vector<256x128xf32>, vector<32x128xf32> -> vector<32x128xf32>
    %96 = arith.addf %93, %95 : vector<32x128xf32>
    %c0_48 = arith.constant 0 : index
    %c0_49 = arith.constant 0 : index
    %97 = vector.load %arg6[%c0_48, %c0_49] : memref<32x128xf32, #tpu.memory_space<vmem>>, vector<32x128xf32>
    tpu.vector_store %arg6[%c0_48, %c0_49], %96 {strides = array<i32>} : memref<32x128xf32, #tpu.memory_space<vmem>>, vector<32x128xf32>,
    %c0_i32_50 = arith.constant 0 : i32
    %98 = arith.cmpi eq, %arg1, %c0_i32_50 : i32
    %99 = arith.extui %98 : i1 to i32
    %c0_i32_51 = arith.constant 0 : i32
    %100 = arith.cmpi ne, %99, %c0_i32_51 : i32
    scf.if %100 {
      %c0_52 = arith.constant 0 : index
      %c0_53 = arith.constant 0 : index
      %101 = vector.load %arg6[%c0_52, %c0_53] : memref<32x128xf32, #tpu.memory_space<vmem>>, vector<32x128xf32>
      %c0_54 = arith.constant 0 : index
      %c0_55 = arith.constant 0 : index
      %102 = vector.load %arg5[%c0_54, %c0_55] : memref<32x128xf32, #tpu.memory_space<vmem>>, vector<32x128xf32>
      tpu.vector_store %arg5[%c0_54, %c0_55], %101 {strides = array<i32>} : memref<32x128xf32, #tpu.memory_space<vmem>>, vector<32x128xf32>,
    } else {
    }
    return
  }
  func.func @transform_0(%arg0: i32, %arg1: i32) -> (i32, i32) {
    %c0_i32 = arith.constant 0 : i32
    %c0_i32_0 = arith.constant 0 : i32
    return %arg0, %c0_i32 : i32, i32
  }
  func.func @transform_1(%arg0: i32, %arg1: i32) -> (i32, i32) {
    %c0_i32 = arith.constant 0 : i32
    %c0_i32_0 = arith.constant 0 : i32
    return %c0_i32, %arg1 : i32, i32
  }
  func.func @transform_2(%arg0: i32, %arg1: i32) -> (i32, i32) {
    %c0_i32 = arith.constant 0 : i32
    %c0_i32_0 = arith.constant 0 : i32
    return %arg1, %c0_i32 : i32, i32
  }
  func.func @transform_3(%arg0: i32, %arg1: i32) -> (i32, i32) {
    %c0_i32 = arith.constant 0 : i32
    %c0_i32_0 = arith.constant 0 : i32
    return %arg0, %c0_i32 : i32, i32
  }
}

module attributes {stable_mosaic.version = 11 : i64} {
  func.func @mlp_kernel(%arg0: i32, %arg1: i32, %arg2: memref<32x128xf32, #tpu.memory_space<vmem>>, %arg3: memref<128x512xf32, #tpu.memory_space<vmem>>, %arg4: memref<512x128xf32, #tpu.memory_space<vmem>>, %arg5: memref<32x128xf32, #tpu.memory_space<vmem>>, %arg6: memref<32x128xf32, #tpu.memory_space<vmem>>) attributes {dimension_semantics = [#tpu.dimension_semantics<parallel>, #tpu.dimension_semantics<arbitrary>], iteration_bounds = array<i64: 1, 1>, scalar_prefetch = 0 : i64, scratch_operands = 1 : i64, tpu.core_type = #tpu.core_type<tc>, window_params = [{transform_indices = @transform_0, window_bounds = array<i64: 32, 128>}, {transform_indices = @transform_1, window_bounds = array<i64: 128, 512>}, {transform_indices = @transform_2, window_bounds = array<i64: 512, 128>}, {transform_indices = @transform_3, window_bounds = array<i64: 32, 128>}]} {
    %c0_i32 = arith.constant 0 : i32
    %0 = arith.cmpi eq, %arg1, %c0_i32 : i32
    %1 = arith.extui %0 : i1 to i32
    %c0_i32_0 = arith.constant 0 : i32
    %2 = arith.cmpi ne, %1, %c0_i32_0 : i32
    scf.if %2 {
      %cst_52 = arith.constant 0.000000e+00 : f32
      %101 = vector.broadcast %cst_52 : f32 to vector<32x128xf32>
      %c0_53 = arith.constant 0 : index
      %c0_54 = arith.constant 0 : index
      %102 = vector.load %arg6[%c0_53, %c0_54] : memref<32x128xf32, #tpu.memory_space<vmem>>, vector<32x128xf32>
      tpu.vector_store %arg6[%c0_53, %c0_54], %101 {strides = array<i32>} : memref<32x128xf32, #tpu.memory_space<vmem>>, vector<32x128xf32>,
    } else {
    }
    %c0 = arith.constant 0 : index
    %c0_1 = arith.constant 0 : index
    %3 = vector.load %arg2[%c0, %c0_1] : memref<32x128xf32, #tpu.memory_space<vmem>>, vector<32x128xf32>
    %c0_2 = arith.constant 0 : index
    %c0_3 = arith.constant 0 : index
    %4 = vector.load %arg3[%c0_2, %c0_3] : memref<128x512xf32, #tpu.memory_space<vmem>>, vector<128x256xf32>
    %cst = arith.constant dense<0.000000e+00> : vector<32x256xf32>
    %5 = tpu.matmul %3, %4, %cst {dimension_numbers = #tpu.dot_dimension_numbers<[1], [0], [0], [1], [0, 0, 1, 1], [], []>} : vector<32x128xf32>, vector<128x256xf32>, vector<32x256xf32> -> vector<32x256xf32>
    %cst_4 = arith.constant 5.000000e-01 : f32
    %6 = vector.broadcast %cst_4 : f32 to vector<32x256xf32>
    %7 = arith.mulf %6, %5 : vector<32x256xf32>
    %cst_5 = arith.constant 0.707106769 : f32
    %8 = vector.broadcast %cst_5 : f32 to vector<32x256xf32>
    %9 = arith.mulf %5, %8 : vector<32x256xf32>
    %cst_6 = arith.constant 0.000000e+00 : f32
    %10 = vector.broadcast %cst_6 : f32 to vector<32x256xf32>
    %11 = arith.cmpf oge, %9, %10 : vector<32x256xf32>
    %cst_7 = arith.constant 1.000000e+00 : f32
    %cst_8 = arith.constant -1.000000e+00 : f32
    %12 = vector.broadcast %cst_7 : f32 to vector<32x256xf32>
    %13 = vector.broadcast %cst_8 : f32 to vector<32x256xf32>
    %14 = arith.select %11, %12, %13 : vector<32x256xi1>, vector<32x256xf32>
    %15 = math.absf %9 : vector<32x256xf32>
    %cst_9 = arith.constant 0.327591091 : f32
    %16 = vector.broadcast %cst_9 : f32 to vector<32x256xf32>
    %17 = arith.mulf %16, %15 : vector<32x256xf32>
    %cst_10 = arith.constant 1.000000e+00 : f32
    %18 = vector.broadcast %cst_10 : f32 to vector<32x256xf32>
    %19 = arith.addf %18, %17 : vector<32x256xf32>
    %20 = tpu.reciprocal %19 {approx = true} : vector<32x256xf32> -> vector<32x256xf32>
    %cst_11 = arith.constant 1.06140542 : f32
    %21 = vector.broadcast %cst_11 : f32 to vector<32x256xf32>
    %22 = arith.mulf %21, %20 : vector<32x256xf32>
    %cst_12 = arith.constant -1.45315206 : f32
    %23 = vector.broadcast %cst_12 : f32 to vector<32x256xf32>
    %24 = arith.addf %22, %23 : vector<32x256xf32>
    %25 = arith.mulf %24, %20 : vector<32x256xf32>
    %cst_13 = arith.constant 1.42141378 : f32
    %26 = vector.broadcast %cst_13 : f32 to vector<32x256xf32>
    %27 = arith.addf %25, %26 : vector<32x256xf32>
    %28 = arith.mulf %27, %20 : vector<32x256xf32>
    %cst_14 = arith.constant -0.284496725 : f32
    %29 = vector.broadcast %cst_14 : f32 to vector<32x256xf32>
    %30 = arith.addf %28, %29 : vector<32x256xf32>
    %31 = arith.mulf %30, %20 : vector<32x256xf32>
    %cst_15 = arith.constant 0.254829586 : f32
    %32 = vector.broadcast %cst_15 : f32 to vector<32x256xf32>
    %33 = arith.addf %31, %32 : vector<32x256xf32>
    %34 = arith.mulf %33, %20 : vector<32x256xf32>
    %cst_16 = arith.constant 0.000000e+00 : f32
    %35 = vector.broadcast %cst_16 : f32 to vector<32x256xf32>
    %36 = arith.subf %35, %15 : vector<32x256xf32>
    %37 = arith.mulf %36, %15 : vector<32x256xf32>
    %38 = math.exp %37 : vector<32x256xf32>
    %39 = arith.mulf %34, %38 : vector<32x256xf32>
    %cst_17 = arith.constant 1.000000e+00 : f32
    %40 = vector.broadcast %cst_17 : f32 to vector<32x256xf32>
    %41 = arith.subf %40, %39 : vector<32x256xf32>
    %42 = arith.mulf %14, %41 : vector<32x256xf32>
    %cst_18 = arith.constant 1.000000e+00 : f32
    %43 = vector.broadcast %cst_18 : f32 to vector<32x256xf32>
    %44 = arith.addf %43, %42 : vector<32x256xf32>
    %45 = arith.mulf %7, %44 : vector<32x256xf32>
    %c0_19 = arith.constant 0 : index
    %c0_20 = arith.constant 0 : index
    %46 = vector.load %arg6[%c0_19, %c0_20] : memref<32x128xf32, #tpu.memory_space<vmem>>, vector<32x128xf32>
    %c0_21 = arith.constant 0 : index
    %c0_22 = arith.constant 0 : index
    %47 = vector.load %arg4[%c0_21, %c0_22] : memref<512x128xf32, #tpu.memory_space<vmem>>, vector<256x128xf32>
    %cst_23 = arith.constant dense<0.000000e+00> : vector<32x128xf32>
    %48 = tpu.matmul %45, %47, %cst_23 {dimension_numbers = #tpu.dot_dimension_numbers<[1], [0], [0], [1], [0, 0, 1, 1], [], []>} : vector<32x256xf32>, vector<256x128xf32>, vector<32x128xf32> -> vector<32x128xf32>
    %49 = arith.addf %46, %48 : vector<32x128xf32>
    %c0_24 = arith.constant 0 : index
    %c0_25 = arith.constant 0 : index
    %50 = vector.load %arg6[%c0_24, %c0_25] : memref<32x128xf32, #tpu.memory_space<vmem>>, vector<32x128xf32>
    tpu.vector_store %arg6[%c0_24, %c0_25], %49 {strides = array<i32>} : memref<32x128xf32, #tpu.memory_space<vmem>>, vector<32x128xf32>,
    %c0_26 = arith.constant 0 : index
    %c256 = arith.constant 256 : index
    %51 = vector.load %arg3[%c0_26, %c256] : memref<128x512xf32, #tpu.memory_space<vmem>>, vector<128x256xf32>
    %cst_27 = arith.constant dense<0.000000e+00> : vector<32x256xf32>
    %52 = tpu.matmul %3, %51, %cst_27 {dimension_numbers = #tpu.dot_dimension_numbers<[1], [0], [0], [1], [0, 0, 1, 1], [], []>} : vector<32x128xf32>, vector<128x256xf32>, vector<32x256xf32> -> vector<32x256xf32>
    %cst_28 = arith.constant 5.000000e-01 : f32
    %53 = vector.broadcast %cst_28 : f32 to vector<32x256xf32>
    %54 = arith.mulf %53, %52 : vector<32x256xf32>
    %cst_29 = arith.constant 0.707106769 : f32
    %55 = vector.broadcast %cst_29 : f32 to vector<32x256xf32>
    %56 = arith.mulf %52, %55 : vector<32x256xf32>
    %cst_30 = arith.constant 0.000000e+00 : f32
    %57 = vector.broadcast %cst_30 : f32 to vector<32x256xf32>
    %58 = arith.cmpf oge, %56, %57 : vector<32x256xf32>
    %cst_31 = arith.constant 1.000000e+00 : f32
    %cst_32 = arith.constant -1.000000e+00 : f32
    %59 = vector.broadcast %cst_31 : f32 to vector<32x256xf32>
    %60 = vector.broadcast %cst_32 : f32 to vector<32x256xf32>
    %61 = arith.select %58, %59, %60 : vector<32x256xi1>, vector<32x256xf32>
    %62 = math.absf %56 : vector<32x256xf32>
    %cst_33 = arith.constant 0.327591091 : f32
    %63 = vector.broadcast %cst_33 : f32 to vector<32x256xf32>
    %64 = arith.mulf %63, %62 : vector<32x256xf32>
    %cst_34 = arith.constant 1.000000e+00 : f32
    %65 = vector.broadcast %cst_34 : f32 to vector<32x256xf32>
    %66 = arith.addf %65, %64 : vector<32x256xf32>
    %67 = tpu.reciprocal %66 {approx = true} : vector<32x256xf32> -> vector<32x256xf32>
    %cst_35 = arith.constant 1.06140542 : f32
    %68 = vector.broadcast %cst_35 : f32 to vector<32x256xf32>
    %69 = arith.mulf %68, %67 : vector<32x256xf32>
    %cst_36 = arith.constant -1.45315206 : f32
    %70 = vector.broadcast %cst_36 : f32 to vector<32x256xf32>
    %71 = arith.addf %69, %70 : vector<32x256xf32>
    %72 = arith.mulf %71, %67 : vector<32x256xf32>
    %cst_37 = arith.constant 1.42141378 : f32
    %73 = vector.broadcast %cst_37 : f32 to vector<32x256xf32>
    %74 = arith.addf %72, %73 : vector<32x256xf32>
    %75 = arith.mulf %74, %67 : vector<32x256xf32>
    %cst_38 = arith.constant -0.284496725 : f32
    %76 = vector.broadcast %cst_38 : f32 to vector<32x256xf32>
    %77 = arith.addf %75, %76 : vector<32x256xf32>
    %78 = arith.mulf %77, %67 : vector<32x256xf32>
    %cst_39 = arith.constant 0.254829586 : f32
    %79 = vector.broadcast %cst_39 : f32 to vector<32x256xf32>
    %80 = arith.addf %78, %79 : vector<32x256xf32>
    %81 = arith.mulf %80, %67 : vector<32x256xf32>
    %cst_40 = arith.constant 0.000000e+00 : f32
    %82 = vector.broadcast %cst_40 : f32 to vector<32x256xf32>
    %83 = arith.subf %82, %62 : vector<32x256xf32>
    %84 = arith.mulf %83, %62 : vector<32x256xf32>
    %85 = math.exp %84 : vector<32x256xf32>
    %86 = arith.mulf %81, %85 : vector<32x256xf32>
    %cst_41 = arith.constant 1.000000e+00 : f32
    %87 = vector.broadcast %cst_41 : f32 to vector<32x256xf32>
    %88 = arith.subf %87, %86 : vector<32x256xf32>
    %89 = arith.mulf %61, %88 : vector<32x256xf32>
    %cst_42 = arith.constant 1.000000e+00 : f32
    %90 = vector.broadcast %cst_42 : f32 to vector<32x256xf32>
    %91 = arith.addf %90, %89 : vector<32x256xf32>
    %92 = arith.mulf %54, %91 : vector<32x256xf32>
    %c0_43 = arith.constant 0 : index
    %c0_44 = arith.constant 0 : index
    %93 = vector.load %arg6[%c0_43, %c0_44] : memref<32x128xf32, #tpu.memory_space<vmem>>, vector<32x128xf32>
    %c256_45 = arith.constant 256 : index
    %c0_46 = arith.constant 0 : index
    %94 = vector.load %arg4[%c256_45, %c0_46] : memref<512x128xf32, #tpu.memory_space<vmem>>, vector<256x128xf32>
    %cst_47 = arith.constant dense<0.000000e+00> : vector<32x128xf32>
    %95 = tpu.matmul %92, %94, %cst_47 {dimension_numbers = #tpu.dot_dimension_numbers<[1], [0], [0], [1], [0, 0, 1, 1], [], []>} : vector<32x256xf32>, vector<256x128xf32>, vector<32x128xf32> -> vector<32x128xf32>
    %96 = arith.addf %93, %95 : vector<32x128xf32>
    %c0_48 = arith.constant 0 : index
    %c0_49 = arith.constant 0 : index
    %97 = vector.load %arg6[%c0_48, %c0_49] : memref<32x128xf32, #tpu.memory_space<vmem>>, vector<32x128xf32>
    tpu.vector_store %arg6[%c0_48, %c0_49], %96 {strides = array<i32>} : memref<32x128xf32, #tpu.memory_space<vmem>>, vector<32x128xf32>,
    %c0_i32_50 = arith.constant 0 : i32
    %98 = arith.cmpi eq, %arg1, %c0_i32_50 : i32
    %99 = arith.extui %98 : i1 to i32
    %c0_i32_51 = arith.constant 0 : i32
    %100 = arith.cmpi ne, %99, %c0_i32_51 : i32
    scf.if %100 {
      %c0_52 = arith.constant 0 : index
      %c0_53 = arith.constant 0 : index
      %101 = vector.load %arg6[%c0_52, %c0_53] : memref<32x128xf32, #tpu.memory_space<vmem>>, vector<32x128xf32>
      %c0_54 = arith.constant 0 : index
      %c0_55 = arith.constant 0 : index
      %102 = vector.load %arg5[%c0_54, %c0_55] : memref<32x128xf32, #tpu.memory_space<vmem>>, vector<32x128xf32>
      tpu.vector_store %arg5[%c0_54, %c0_55], %101 {strides = array<i32>} : memref<32x128xf32, #tpu.memory_space<vmem>>, vector<32x128xf32>,
    } else {
    }
    return
  }
  func.func @transform_0(%arg0: i32, %arg1: i32) -> (i32, i32) {
    %c0_i32 = arith.constant 0 : i32
    %c0_i32_0 = arith.constant 0 : i32
    return %arg0, %c0_i32 : i32, i32
  }
  func.func @transform_1(%arg0: i32, %arg1: i32) -> (i32, i32) {
    %c0_i32 = arith.constant 0 : i32
    %c0_i32_0 = arith.constant 0 : i32
    return %c0_i32, %arg1 : i32, i32
  }
  func.func @transform_2(%arg0: i32, %arg1: i32) -> (i32, i32) {
    %c0_i32 = arith.constant 0 : i32
    %c0_i32_0 = arith.constant 0 : i32
    return %arg1, %c0_i32 : i32, i32
  }
  func.func @transform_3(%arg0: i32, %arg1: i32) -> (i32, i32) {
    %c0_i32 = arith.constant 0 : i32
    %c0_i32_0 = arith.constant 0 : i32
    return %arg0, %c0_i32 : i32, i32
  }
}

</mosaic_0001>

<llo_original>
// kernel: tpu_custom_call.1
$region0: #{tpu_custom_call.1}
  #allocation0 [shape = 'u32[]', space=smem, size = 0x4, offset = 0x4, fixed_abs, tag = 'smem constant byte address 0x4 - core index']
  #allocation1 [shape = 'u32[144,128]{1,0:T(1,128)}', space=vmem, size = 0x12000, scoped, tag = 'internal scratch']
  #allocation2 [shape = 'f32[32,128]{1,0:T(8,128)}', space=vmem, size = 0x4000, scoped, tag = 'scratch operand']
  %s0 = inlined_call_operand.hbm [shape: f32[32,128], index: 0, kind: input, shape index: {}]
  %s1 = inlined_call_operand.hbm [shape: f32[128,512], index: 1, kind: input, shape index: {}]
  %s2 = inlined_call_operand.hbm [shape: f32[512,128], index: 2, kind: input, shape index: {}]
  %s3 = inlined_call_operand.hbm [shape: f32[32,128], index: 3, kind: output, shape index: {}]
  %s4 = sld [smem:[#allocation0]]
  $region42: #{tpu_custom_call.1} parent=0
    _
  %s6 = ssub.s32 1, %s4
  %s7 = scalar_select 0, %s6, %s4
  $region1: #{tpu_custom_call.1} parent=0
    #allocation3 [shape = 'u8[16384]{0}', space=vmem, size = 0x4000, scoped, tag = 'input window, operand 0, single buffered']
    #allocation4 [shape = 's32[1]{0}', space=sflag, size = 0x4, scoped, tag = 'scoped memory for tpu_custom_call.1']
    #allocation5 [shape = 's32[1]{0}', space=sflag, size = 0x4, scoped, tag = 'scoped memory for tpu_custom_call.1']
    #allocation6 [shape = 'u8[262144]{0}', space=vmem, size = 0x40000, scoped, tag = 'input window, operand 1, single buffered']
    #allocation7 [shape = 's32[1]{0}', space=sflag, size = 0x4, scoped, tag = 'scoped memory for tpu_custom_call.1']
    #allocation8 [shape = 'u8[262144]{0}', space=vmem, size = 0x40000, scoped, tag = 'input window, operand 2, single buffered']
    #allocation9 [shape = 'u8[16384]{0}', space=vmem, size = 0x4000, scoped, tag = 'output window, operand 0, single buffered']
    %8 = vsyncpa [#allocation4], 0
    %9 = vsyncpa [#allocation7], 0
    %10 = vsyncpa [#allocation5], 0
    // Predicated region
    $region2: #{tpu_custom_call.1} parent=1 // pred_check
      _
    $region3: #{tpu_custom_call.1} parent=1 // pred_check_branch
      %12 = sbr.rel (0) target = $region5
    $region4: #{tpu_custom_call.1} parent=1 // pred_region
      %s14 = ssub.s32 512, 512
      %15 = vsyncadd [#allocation4], %s14
      %s16 = sshll.u32 [#allocation3], 4
      %s17 = int_to_ptr.vmem [resolvable:$true] %s16
      %22 = dma.hbm_to_vmem [thread:$0]  %s0, 512, %s17, [#allocation4], 128, 128, 8
    $region5: #{tpu_custom_call.1} parent=1 // pred_fallthru
      _
    // Predicated region
    $region6: #{tpu_custom_call.1} parent=1 // pred_check
      _
    $region7: #{tpu_custom_call.1} parent=1 // pred_check_branch
      %24 = sbr.rel (0) target = $region9
    $region8: #{tpu_custom_call.1} parent=1 // pred_region
      %s26 = ssub.s32 8192, 8192
      %27 = vsyncadd [#allocation7], %s26
      %s28 = sshll.u32 [#allocation6], 4
      %s29 = int_to_ptr.vmem [resolvable:$true] %s28
      %34 = dma.hbm_to_vmem [thread:$0]  %s1, 8192, %s29, [#allocation7], 512, 512, 32
    $region9: #{tpu_custom_call.1} parent=1 // pred_fallthru
      _
    // Predicated region
    $region10: #{tpu_custom_call.1} parent=1 // pred_check
      _
    $region11: #{tpu_custom_call.1} parent=1 // pred_check_branch
      %36 = sbr.rel (0) target = $region13
    $region12: #{tpu_custom_call.1} parent=1 // pred_region
      %s38 = ssub.s32 8192, 8192
      %39 = vsyncadd [#allocation7], %s38
      %s40 = sshll.u32 [#allocation8], 4
      %s41 = int_to_ptr.vmem [resolvable:$true] %s40
      %46 = dma.hbm_to_vmem [thread:$0]  %s2, 8192, %s41, [#allocation7], 128, 128, 8
    $region13: #{tpu_custom_call.1} parent=1 // pred_fallthru
      _
    // Predicated region
    $region14: #{tpu_custom_call.1} parent=1 // pred_check
      _
    $region15: #{tpu_custom_call.1} parent=1 // pred_check_branch
      %48 = sbr.rel (0) target = $region17
    $region16: #{tpu_custom_call.1} parent=1 // pred_region
      %49 = dma.done [#allocation4], 512
    $region17: #{tpu_custom_call.1} parent=1 // pred_fallthru
      _
    // Predicated region
    $region18: #{tpu_custom_call.1} parent=1 // pred_check
      _
    $region19: #{tpu_custom_call.1} parent=1 // pred_check_branch
      %51 = sbr.rel (0) target = $region21
    $region20: #{tpu_custom_call.1} parent=1 // pred_region
      %52 = dma.done [#allocation7], 8192
    $region21: #{tpu_custom_call.1} parent=1 // pred_fallthru
      _
    // Predicated region
    $region22: #{tpu_custom_call.1} parent=1 // pred_check
      _
    $region23: #{tpu_custom_call.1} parent=1 // pred_check_branch
      %54 = sbr.rel (0) target = $region25
    $region24: #{tpu_custom_call.1} parent=1 // pred_region
      %55 = dma.done [#allocation7], 8192
    $region25: #{tpu_custom_call.1} parent=1 // pred_fallthru
      _
    %p56 = scmp.eq.s32.totalorder 0, 0
    // Predicated region
    $region26: #{tpu_custom_call.1} parent=1 // pred_check
      %p57 = pneg %p56
    $region27: #{tpu_custom_call.1} parent=1 // pred_check_branch
      %59 = sbr.rel (%p57) target = $region29
    $region28: #{tpu_custom_call.1} parent=1 // pred_region
      %60 = vst [vmem:[#allocation2] sm:$0xff] 0.0
      %61 = vst [vmem:[#allocation2 + $0x8] sm:$0xff] 0.0
      %62 = vst [vmem:[#allocation2 + $0x10] sm:$0xff] 0.0
      %63 = vst [vmem:[#allocation2 + $0x18] sm:$0xff] 0.0
    $region29: #{tpu_custom_call.1} parent=1 // pred_fallthru
      _
    %v64 = vld [vmem:[#allocation3] sm:$0xff]
    %v65 = vld [vmem:[#allocation3 + $0x8] sm:$0xff]
    %v66 = vld [vmem:[#allocation3 + $0x10] sm:$0xff]
    %v67 = vld [vmem:[#allocation3 + $0x18] sm:$0xff]
    %v68 = vld [vmem:[#allocation6] sm:$0xff]
    %v69 = vld [vmem:[#allocation6 + $0x8] sm:$0xff]
    %v70 = vld [vmem:[#allocation6 + $0x20] sm:$0xff]
    %v71 = vld [vmem:[#allocation6 + $0x28] sm:$0xff]
    %v72 = vld [vmem:[#allocation6 + $0x40] sm:$0xff]
    %v73 = vld [vmem:[#allocation6 + $0x48] sm:$0xff]
    %v74 = vld [vmem:[#allocation6 + $0x60] sm:$0xff]
    %v75 = vld [vmem:[#allocation6 + $0x68] sm:$0xff]
    %v76 = vld [vmem:[#allocation6 + $0x80] sm:$0xff]
    %v77 = vld [vmem:[#allocation6 + $0x88] sm:$0xff]
    %v78 = vld [vmem:[#allocation6 + $0xa0] sm:$0xff]
    %v79 = vld [vmem:[#allocation6 + $0xa8] sm:$0xff]
    %v80 = vld [vmem:[#allocation6 + $0xc0] sm:$0xff]
    %v81 = vld [vmem:[#allocation6 + $0xc8] sm:$0xff]
    %v82 = vld [vmem:[#allocation6 + $0xe0] sm:$0xff]
    %v83 = vld [vmem:[#allocation6 + $0xe8] sm:$0xff]
    %v84 = vld [vmem:[#allocation6 + $0x100] sm:$0xff]
    %v85 = vld [vmem:[#allocation6 + $0x108] sm:$0xff]
    %v86 = vld [vmem:[#allocation6 + $0x120] sm:$0xff]
    %v87 = vld [vmem:[#allocation6 + $0x128] sm:$0xff]
    %v88 = vld [vmem:[#allocation6 + $0x140] sm:$0xff]
    %v89 = vld [vmem:[#allocation6 + $0x148] sm:$0xff]
    %v90 = vld [vmem:[#allocation6 + $0x160] sm:$0xff]
    %v91 = vld [vmem:[#allocation6 + $0x168] sm:$0xff]
    %v92 = vld [vmem:[#allocation6 + $0x180] sm:$0xff]
    %v93 = vld [vmem:[#allocation6 + $0x188] sm:$0xff]
    %v94 = vld [vmem:[#allocation6 + $0x1a0] sm:$0xff]
    %v95 = vld [vmem:[#allocation6 + $0x1a8] sm:$0xff]
    %v96 = vld [vmem:[#allocation6 + $0x1c0] sm:$0xff]
    %v97 = vld [vmem:[#allocation6 + $0x1c8] sm:$0xff]
    %v98 = vld [vmem:[#allocation6 + $0x1e0] sm:$0xff]
    %v99 = vld [vmem:[#allocation6 + $0x1e8] sm:$0xff]
    %100 = vmatprep.subr.mxu0 %v69
    %101 = vmatpush1.msra.mxu0 %v68
    %102 = vmatprep.subr.mxu0 %v71
    %103 = vmatpush1.msra.mxu0 %v70
    %104 = vmatprep.subr.mxu0 %v73
    %105 = vmatpush1.msra.mxu0 %v72
    %106 = vmatprep.subr.mxu0 %v75
    %107 = vmatpush1.msra.mxu0 %v74
    %108 = vmatprep.subr.mxu0 %v77
    %109 = vmatpush1.msra.mxu0 %v76
    %110 = vmatprep.subr.mxu0 %v79
    %111 = vmatpush1.msra.mxu0 %v78
    %112 = vmatprep.subr.mxu0 %v81
    %113 = vmatpush1.msra.mxu0 %v80
    %114 = vmatprep.subr.mxu0 %v83
    %115 = vmatpush1.msra.mxu0 %v82
    %116 = vmatprep.subr.mxu0 %v85
    %117 = vmatpush1.msra.mxu0 %v84
    %118 = vmatprep.subr.mxu0 %v87
    %119 = vmatpush1.msra.mxu0 %v86
    %120 = vmatprep.subr.mxu0 %v89
    %121 = vmatpush1.msra.mxu0 %v88
    %122 = vmatprep.subr.mxu0 %v91
    %123 = vmatpush1.msra.mxu0 %v90
    %124 = vmatprep.subr.mxu0 %v93
    %125 = vmatpush1.msra.mxu0 %v92
    %126 = vmatprep.subr.mxu0 %v95
    %127 = vmatpush1.msra.mxu0 %v94
    %128 = vmatprep.subr.mxu0 %v97
    %129 = vmatpush1.msra.mxu0 %v96
    %130 = vmatprep.subr.mxu0 %v99
    %131 = vmatpush1.msra.mxu0 %v98
    %132 = vmatprep.subr.mxu0 0.0
    %133 = vmatpush1.msra.mxu0 0.0
    %134 = vmatprep.subr.mxu0 0.0
    %135 = vmatpush1.msra.mxu0 0.0
    %136 = vmatprep.subr.mxu0 0.0
    %137 = vmatpush1.msra.mxu0 0.0
    %138 = vmatprep.subr.mxu0 0.0
    %139 = vmatpush1.msra.mxu0 0.0
    %140 = vmatprep.subr.mxu0 0.0
    %141 = vmatpush1.msra.mxu0 0.0
    %142 = vmatprep.subr.mxu0 0.0
    %143 = vmatpush1.msra.mxu0 0.0
    %144 = vmatprep.subr.mxu0 0.0
    %145 = vmatpush1.msra.mxu0 0.0
    %146 = vmatprep.subr.mxu0 0.0
    %147 = vmatpush1.msra.mxu0 0.0
    %148 = vmatprep.subr.mxu0 0.0
    %149 = vmatpush1.msra.mxu0 0.0
    %150 = vmatprep.subr.mxu0 0.0
    %151 = vmatpush1.msra.mxu0 0.0
    %152 = vmatprep.subr.mxu0 0.0
    %153 = vmatpush1.msra.mxu0 0.0
    %154 = vmatprep.subr.mxu0 0.0
    %155 = vmatpush1.msra.mxu0 0.0
    %156 = vmatprep.subr.mxu0 0.0
    %157 = vmatpush1.msra.mxu0 0.0
    %158 = vmatprep.subr.mxu0 0.0
    %159 = vmatpush1.msra.mxu0 0.0
    %160 = vmatprep.subr.mxu0 0.0
    %161 = vmatpush1.msra.mxu0 0.0
    %162 = vmatprep.subr.mxu0 0.0
    %163 = vmatpush1.msra.mxu0 0.0
    %164 = vmatprep.mubr.f32.mxu0 0.0
    %165 = vmatmul.mubr.f32.gmra.mrb[0].mxu0 %v64
    %v166 = vpop.f32.mrb[0].mxu0
    %v167 = vadd.f32 0.0, %v166
    %v168 = vpop.f32.mrb[0].mxu0
    %v169 = vadd.f32 0.0, %v168
    %170 = vmatprep.mubr.f32.mxu0 0.0
    %171 = vmatmul.mubr.f32.gmra.mrb[0].mxu0 %v65
    %v172 = vpop.f32.mrb[0].mxu0
    %v173 = vadd.f32 0.0, %v172
    %v174 = vpop.f32.mrb[0].mxu0
    %v175 = vadd.f32 0.0, %v174
    %176 = vmatprep.mubr.f32.mxu0 0.0
    %177 = vmatmul.mubr.f32.gmra.mrb[0].mxu0 %v66
    %v178 = vpop.f32.mrb[0].mxu0
    %v179 = vadd.f32 0.0, %v178
    %v180 = vpop.f32.mrb[0].mxu0
    %v181 = vadd.f32 0.0, %v180
    %182 = vmatprep.mubr.f32.mxu0 0.0
    %183 = vmatmul.mubr.f32.gmra.mrb[0].mxu0 %v67
    %v184 = vpop.f32.mrb[0].mxu0
    %v185 = vadd.f32 0.0, %v184
    %v186 = vpop.f32.mrb[0].mxu0
    %v187 = vadd.f32 0.0, %v186
    %188 = vdwg.mxu0
    %v189 = vmul.f32 %v167, 0.5
    %v190 = vmul.f32 %v169, 0.5
    %v191 = vmul.f32 %v173, 0.5
    %v192 = vmul.f32 %v175, 0.5
    %v193 = vmul.f32 %v179, 0.5
    %v194 = vmul.f32 %v181, 0.5
    %v195 = vmul.f32 %v185, 0.5
    %v196 = vmul.f32 %v187, 0.5
    %v197 = vmul.f32 %v167, 0.70710677
    %v198 = vmul.f32 %v169, 0.70710677
    %v199 = vmul.f32 %v173, 0.70710677
    %v200 = vmul.f32 %v175, 0.70710677
    %v201 = vmul.f32 %v179, 0.70710677
    %v202 = vmul.f32 %v181, 0.70710677
    %v203 = vmul.f32 %v185, 0.70710677
    %v204 = vmul.f32 %v187, 0.70710677
    %vm205 = vcmp.ge.f32.partialorder %v197, 0.0
    %vm206 = vcmp.ge.f32.partialorder %v198, 0.0
    %vm207 = vcmp.ge.f32.partialorder %v199, 0.0
    %vm208 = vcmp.ge.f32.partialorder %v200, 0.0
    %vm209 = vcmp.ge.f32.partialorder %v201, 0.0
    %vm210 = vcmp.ge.f32.partialorder %v202, 0.0
    %vm211 = vcmp.ge.f32.partialorder %v203, 0.0
    %vm212 = vcmp.ge.f32.partialorder %v204, 0.0
    %v213 = vsel %vm205, 1.0, -1.0
    %v214 = vsel %vm206, 1.0, -1.0
    %v215 = vsel %vm207, 1.0, -1.0
    %v216 = vsel %vm208, 1.0, -1.0
    %v217 = vsel %vm209, 1.0, -1.0
    %v218 = vsel %vm210, 1.0, -1.0
    %v219 = vsel %vm211, 1.0, -1.0
    %v220 = vsel %vm212, 1.0, -1.0
    %v221 = vand.u32 2147483647, %v197
    %v222 = vand.u32 2147483647, %v198
    %v223 = vand.u32 2147483647, %v199
    %v224 = vand.u32 2147483647, %v200
    %v225 = vand.u32 2147483647, %v201
    %v226 = vand.u32 2147483647, %v202
    %v227 = vand.u32 2147483647, %v203
    %v228 = vand.u32 2147483647, %v204
    %v229 = vmul.f32 %v221, 0.3275911
    %v230 = vmul.f32 %v222, 0.3275911
    %v231 = vmul.f32 %v223, 0.3275911
    %v232 = vmul.f32 %v224, 0.3275911
    %v233 = vmul.f32 %v225, 0.3275911
    %v234 = vmul.f32 %v226, 0.3275911
    %v235 = vmul.f32 %v227, 0.3275911
    %v236 = vmul.f32 %v228, 0.3275911
    %v237 = vadd.f32 %v229, 1.0
    %v238 = vadd.f32 %v230, 1.0
    %v239 = vadd.f32 %v231, 1.0
    %v240 = vadd.f32 %v232, 1.0
    %v241 = vadd.f32 %v233, 1.0
    %v242 = vadd.f32 %v234, 1.0
    %v243 = vadd.f32 %v235, 1.0
    %v244 = vadd.f32 %v236, 1.0
    %v245 = vrcp.pop %v237
    %v246 = vrcp.pop %v238
    %v247 = vrcp.pop %v239
    %v248 = vrcp.pop %v240
    %v249 = vrcp.pop %v241
    %v250 = vrcp.pop %v242
    %v251 = vrcp.pop %v243
    %v252 = vrcp.pop %v244
    %v253 = vmul.f32 %v245, 1.0614054
    %v254 = vmul.f32 %v246, 1.0614054
    %v255 = vmul.f32 %v247, 1.0614054
    %v256 = vmul.f32 %v248, 1.0614054
    %v257 = vmul.f32 %v249, 1.0614054
    %v258 = vmul.f32 %v250, 1.0614054
    %v259 = vmul.f32 %v251, 1.0614054
    %v260 = vmul.f32 %v252, 1.0614054
    %v261 = vadd.f32 %v253, -1.4531521
    %v262 = vadd.f32 %v254, -1.4531521
    %v263 = vadd.f32 %v255, -1.4531521
    %v264 = vadd.f32 %v256, -1.4531521
    %v265 = vadd.f32 %v257, -1.4531521
    %v266 = vadd.f32 %v258, -1.4531521
    %v267 = vadd.f32 %v259, -1.4531521
    %v268 = vadd.f32 %v260, -1.4531521
    %v269 = vmul.f32 %v261, %v245
    %v270 = vmul.f32 %v262, %v246
    %v271 = vmul.f32 %v263, %v247
    %v272 = vmul.f32 %v264, %v248
    %v273 = vmul.f32 %v265, %v249
    %v274 = vmul.f32 %v266, %v250
    %v275 = vmul.f32 %v267, %v251
    %v276 = vmul.f32 %v268, %v252
    %v277 = vadd.f32 %v269, 1.4214138
    %v278 = vadd.f32 %v270, 1.4214138
    %v279 = vadd.f32 %v271, 1.4214138
    %v280 = vadd.f32 %v272, 1.4214138
    %v281 = vadd.f32 %v273, 1.4214138
    %v282 = vadd.f32 %v274, 1.4214138
    %v283 = vadd.f32 %v275, 1.4214138
    %v284 = vadd.f32 %v276, 1.4214138
    %v285 = vmul.f32 %v277, %v245
    %v286 = vmul.f32 %v278, %v246
    %v287 = vmul.f32 %v279, %v247
    %v288 = vmul.f32 %v280, %v248
    %v289 = vmul.f32 %v281, %v249
    %v290 = vmul.f32 %v282, %v250
    %v291 = vmul.f32 %v283, %v251
    %v292 = vmul.f32 %v284, %v252
    %v293 = vadd.f32 %v285, -0.28449672
    %v294 = vadd.f32 %v286, -0.28449672
    %v295 = vadd.f32 %v287, -0.28449672
    %v296 = vadd.f32 %v288, -0.28449672
    %v297 = vadd.f32 %v289, -0.28449672
    %v298 = vadd.f32 %v290, -0.28449672
    %v299 = vadd.f32 %v291, -0.28449672
    %v300 = vadd.f32 %v292, -0.28449672
    %v301 = vmul.f32 %v293, %v245
    %v302 = vmul.f32 %v294, %v246
    %v303 = vmul.f32 %v295, %v247
    %v304 = vmul.f32 %v296, %v248
    %v305 = vmul.f32 %v297, %v249
    %v306 = vmul.f32 %v298, %v250
    %v307 = vmul.f32 %v299, %v251
    %v308 = vmul.f32 %v300, %v252
    %v309 = vadd.f32 %v301, 0.2548296
    %v310 = vadd.f32 %v302, 0.2548296
    %v311 = vadd.f32 %v303, 0.2548296
    %v312 = vadd.f32 %v304, 0.2548296
    %v313 = vadd.f32 %v305, 0.2548296
    %v314 = vadd.f32 %v306, 0.2548296
    %v315 = vadd.f32 %v307, 0.2548296
    %v316 = vadd.f32 %v308, 0.2548296
    %v317 = vmul.f32 %v309, %v245
    %v318 = vmul.f32 %v310, %v246
    %v319 = vmul.f32 %v311, %v247
    %v320 = vmul.f32 %v312, %v248
    %v321 = vmul.f32 %v313, %v249
    %v322 = vmul.f32 %v314, %v250
    %v323 = vmul.f32 %v315, %v251
    %v324 = vmul.f32 %v316, %v252
    %v325 = vsub.f32 0.0, %v221
    %v326 = vsub.f32 0.0, %v222
    %v327 = vsub.f32 0.0, %v223
    %v328 = vsub.f32 0.0, %v224
    %v329 = vsub.f32 0.0, %v225
    %v330 = vsub.f32 0.0, %v226
    %v331 = vsub.f32 0.0, %v227
    %v332 = vsub.f32 0.0, %v228
    %v333 = vmul.f32 %v325, %v221
    %v334 = vmul.f32 %v326, %v222
    %v335 = vmul.f32 %v327, %v223
    %v336 = vmul.f32 %v328, %v224
    %v337 = vmul.f32 %v329, %v225
    %v338 = vmul.f32 %v330, %v226
    %v339 = vmul.f32 %v331, %v227
    %v340 = vmul.f32 %v332, %v228
    %v341 = vmul.f32 %v333, 1.442695
    %v342 = vpow.pop %v341
    %v343 = vmul.f32 %v334, 1.442695
    %v344 = vpow.pop %v343
    %v345 = vmul.f32 %v335, 1.442695
    %v346 = vpow.pop %v345
    %v347 = vmul.f32 %v336, 1.442695
    %v348 = vpow.pop %v347
    %v349 = vmul.f32 %v337, 1.442695
    %v350 = vpow.pop %v349
    %v351 = vmul.f32 %v338, 1.442695
    %v352 = vpow.pop %v351
    %v353 = vmul.f32 %v339, 1.442695
    %v354 = vpow.pop %v353
    %v355 = vmul.f32 %v340, 1.442695
    %v356 = vpow.pop %v355
    %v357 = vmul.f32 %v317, %v342
    %v358 = vmul.f32 %v318, %v344
    %v359 = vmul.f32 %v319, %v346
    %v360 = vmul.f32 %v320, %v348
    %v361 = vmul.f32 %v321, %v350
    %v362 = vmul.f32 %v322, %v352
    %v363 = vmul.f32 %v323, %v354
    %v364 = vmul.f32 %v324, %v356
    %v365 = vsub.f32 1.0, %v357
    %v366 = vsub.f32 1.0, %v358
    %v367 = vsub.f32 1.0, %v359
    %v368 = vsub.f32 1.0, %v360
    %v369 = vsub.f32 1.0, %v361
    %v370 = vsub.f32 1.0, %v362
    %v371 = vsub.f32 1.0, %v363
    %v372 = vsub.f32 1.0, %v364
    %v373 = vmul.f32 %v213, %v365
    %v374 = vmul.f32 %v214, %v366
    %v375 = vmul.f32 %v215, %v367
    %v376 = vmul.f32 %v216, %v368
    %v377 = vmul.f32 %v217, %v369
    %v378 = vmul.f32 %v218, %v370
    %v379 = vmul.f32 %v219, %v371
    %v380 = vmul.f32 %v220, %v372
    %v381 = vadd.f32 %v373, 1.0
    %v382 = vadd.f32 %v374, 1.0
    %v383 = vadd.f32 %v375, 1.0
    %v384 = vadd.f32 %v376, 1.0
    %v385 = vadd.f32 %v377, 1.0
    %v386 = vadd.f32 %v378, 1.0
    %v387 = vadd.f32 %v379, 1.0
    %v388 = vadd.f32 %v380, 1.0
    %v389 = vmul.f32 %v189, %v381
    %v390 = vmul.f32 %v190, %v382
    %v391 = vmul.f32 %v191, %v383
    %v392 = vmul.f32 %v192, %v384
    %v393 = vmul.f32 %v193, %v385
    %v394 = vmul.f32 %v194, %v386
    %v395 = vmul.f32 %v195, %v387
    %v396 = vmul.f32 %v196, %v388
    %v397 = vld [vmem:[#allocation2] sm:$0xff]
    %v398 = vld [vmem:[#allocation2 + $0x8] sm:$0xff]
    %v399 = vld [vmem:[#allocation2 + $0x10] sm:$0xff]
    %v400 = vld [vmem:[#allocation2 + $0x18] sm:$0xff]
    %v401 = vld [vmem:[#allocation8] sm:$0xff]
    %v402 = vld [vmem:[#allocation8 + $0x8] sm:$0xff]
    %v403 = vld [vmem:[#allocation8 + $0x10] sm:$0xff]
    %v404 = vld [vmem:[#allocation8 + $0x18] sm:$0xff]
    %v405 = vld [vmem:[#allocation8 + $0x20] sm:$0xff]
    %v406 = vld [vmem:[#allocation8 + $0x28] sm:$0xff]
    %v407 = vld [vmem:[#allocation8 + $0x30] sm:$0xff]
    %v408 = vld [vmem:[#allocation8 + $0x38] sm:$0xff]
    %v409 = vld [vmem:[#allocation8 + $0x40] sm:$0xff]
    %v410 = vld [vmem:[#allocation8 + $0x48] sm:$0xff]
    %v411 = vld [vmem:[#allocation8 + $0x50] sm:$0xff]
    %v412 = vld [vmem:[#allocation8 + $0x58] sm:$0xff]
    %v413 = vld [vmem:[#allocation8 + $0x60] sm:$0xff]
    %v414 = vld [vmem:[#allocation8 + $0x68] sm:$0xff]
    %v415 = vld [vmem:[#allocation8 + $0x70] sm:$0xff]
    %v416 = vld [vmem:[#allocation8 + $0x78] sm:$0xff]
    %v417 = vld [vmem:[#allocation8 + $0x80] sm:$0xff]
    %v418 = vld [vmem:[#allocation8 + $0x88] sm:$0xff]
    %v419 = vld [vmem:[#allocation8 + $0x90] sm:$0xff]
    %v420 = vld [vmem:[#allocation8 + $0x98] sm:$0xff]
    %v421 = vld [vmem:[#allocation8 + $0xa0] sm:$0xff]
    %v422 = vld [vmem:[#allocation8 + $0xa8] sm:$0xff]
    %v423 = vld [vmem:[#allocation8 + $0xb0] sm:$0xff]
    %v424 = vld [vmem:[#allocation8 + $0xb8] sm:$0xff]
    %v425 = vld [vmem:[#allocation8 + $0xc0] sm:$0xff]
    %v426 = vld [vmem:[#allocation8 + $0xc8] sm:$0xff]
    %v427 = vld [vmem:[#allocation8 + $0xd0] sm:$0xff]
    %v428 = vld [vmem:[#allocation8 + $0xd8] sm:$0xff]
    %v429 = vld [vmem:[#allocation8 + $0xe0] sm:$0xff]
    %v430 = vld [vmem:[#allocation8 + $0xe8] sm:$0xff]
    %v431 = vld [vmem:[#allocation8 + $0xf0] sm:$0xff]
    %v432 = vld [vmem:[#allocation8 + $0xf8] sm:$0xff]
    %433 = vmatprep.subr.mxu0 0.0
    %434 = vmatpush1.msra.mxu0 %v401
    %435 = vmatprep.subr.mxu0 0.0
    %436 = vmatpush1.msra.mxu0 %v402
    %437 = vmatprep.subr.mxu0 0.0
    %438 = vmatpush1.msra.mxu0 %v403
    %439 = vmatprep.subr.mxu0 0.0
    %440 = vmatpush1.msra.mxu0 %v404
    %441 = vmatprep.subr.mxu0 0.0
    %442 = vmatpush1.msra.mxu0 %v405
    %443 = vmatprep.subr.mxu0 0.0
    %444 = vmatpush1.msra.mxu0 %v406
    %445 = vmatprep.subr.mxu0 0.0
    %446 = vmatpush1.msra.mxu0 %v407
    %447 = vmatprep.subr.mxu0 0.0
    %448 = vmatpush1.msra.mxu0 %v408
    %449 = vmatprep.subr.mxu0 0.0
    %450 = vmatpush1.msra.mxu0 %v409
    %451 = vmatprep.subr.mxu0 0.0
    %452 = vmatpush1.msra.mxu0 %v410
    %453 = vmatprep.subr.mxu0 0.0
    %454 = vmatpush1.msra.mxu0 %v411
    %455 = vmatprep.subr.mxu0 0.0
    %456 = vmatpush1.msra.mxu0 %v412
    %457 = vmatprep.subr.mxu0 0.0
    %458 = vmatpush1.msra.mxu0 %v413
    %459 = vmatprep.subr.mxu0 0.0
    %460 = vmatpush1.msra.mxu0 %v414
    %461 = vmatprep.subr.mxu0 0.0
    %462 = vmatpush1.msra.mxu0 %v415
    %463 = vmatprep.subr.mxu0 0.0
    %464 = vmatpush1.msra.mxu0 %v416
    %465 = vmatprep.subr.mxu0 0.0
    %466 = vmatpush1.msra.mxu0 %v417
    %467 = vmatprep.subr.mxu0 0.0
    %468 = vmatpush1.msra.mxu0 %v418
    %469 = vmatprep.subr.mxu0 0.0
    %470 = vmatpush1.msra.mxu0 %v419
    %471 = vmatprep.subr.mxu0 0.0
    %472 = vmatpush1.msra.mxu0 %v420
    %473 = vmatprep.subr.mxu0 0.0
    %474 = vmatpush1.msra.mxu0 %v421
    %475 = vmatprep.subr.mxu0 0.0
    %476 = vmatpush1.msra.mxu0 %v422
    %477 = vmatprep.subr.mxu0 0.0
    %478 = vmatpush1.msra.mxu0 %v423
    %479 = vmatprep.subr.mxu0 0.0
    %480 = vmatpush1.msra.mxu0 %v424
    %481 = vmatprep.subr.mxu0 0.0
    %482 = vmatpush1.msra.mxu0 %v425
    %483 = vmatprep.subr.mxu0 0.0
    %484 = vmatpush1.msra.mxu0 %v426
    %485 = vmatprep.subr.mxu0 0.0
    %486 = vmatpush1.msra.mxu0 %v427
    %487 = vmatprep.subr.mxu0 0.0
    %488 = vmatpush1.msra.mxu0 %v428
    %489 = vmatprep.subr.mxu0 0.0
    %490 = vmatpush1.msra.mxu0 %v429
    %491 = vmatprep.subr.mxu0 0.0
    %492 = vmatpush1.msra.mxu0 %v430
    %493 = vmatprep.subr.mxu0 0.0
    %494 = vmatpush1.msra.mxu0 %v431
    %495 = vmatprep.subr.mxu0 0.0
    %496 = vmatpush1.msra.mxu0 %v432
    %497 = vmatprep.mubr.f32.mxu0 %v390
    %498 = vmatmul.mubr.f32.gmra.mrb[0].mxu0 %v389
    %v499 = vpop.f32.mrb[0].mxu0
    %v500 = vadd.f32 0.0, %v499
    %v501 = vpop.f32.mrb[0].mxu0
    %502 = vmatprep.mubr.f32.mxu0 %v392
    %503 = vmatmul.mubr.f32.gmra.mrb[0].mxu0 %v391
    %v504 = vpop.f32.mrb[0].mxu0
    %v505 = vadd.f32 0.0, %v504
    %v506 = vpop.f32.mrb[0].mxu0
    %507 = vmatprep.mubr.f32.mxu0 %v394
    %508 = vmatmul.mubr.f32.gmra.mrb[0].mxu0 %v393
    %v509 = vpop.f32.mrb[0].mxu0
    %v510 = vadd.f32 0.0, %v509
    %v511 = vpop.f32.mrb[0].mxu0
    %512 = vmatprep.mubr.f32.mxu0 %v396
    %513 = vmatmul.mubr.f32.gmra.mrb[0].mxu0 %v395
    %v514 = vpop.f32.mrb[0].mxu0
    %v515 = vadd.f32 0.0, %v514
    %v516 = vpop.f32.mrb[0].mxu0
    %517 = vdwg.mxu0
    %v518 = vadd.f32 %v397, %v500
    %v519 = vadd.f32 %v398, %v505
    %v520 = vadd.f32 %v399, %v510
    %v521 = vadd.f32 %v400, %v515
    %522 = vst [vmem:[#allocation2] sm:$0xff] %v518
    %523 = vst [vmem:[#allocation2 + $0x8] sm:$0xff] %v519
    %524 = vst [vmem:[#allocation2 + $0x10] sm:$0xff] %v520
    %525 = vst [vmem:[#allocation2 + $0x18] sm:$0xff] %v521
    %v526 = vld [vmem:[#allocation6 + $0x10] sm:$0xff]
    %v527 = vld [vmem:[#allocation6 + $0x18] sm:$0xff]
    %v528 = vld [vmem:[#allocation6 + $0x30] sm:$0xff]
    %v529 = vld [vmem:[#allocation6 + $0x38] sm:$0xff]
    %v530 = vld [vmem:[#allocation6 + $0x50] sm:$0xff]
    %v531 = vld [vmem:[#allocation6 + $0x58] sm:$0xff]
    %v532 = vld [vmem:[#allocation6 + $0x70] sm:$0xff]
    %v533 = vld [vmem:[#allocation6 + $0x78] sm:$0xff]
    %v534 = vld [vmem:[#allocation6 + $0x90] sm:$0xff]
    %v535 = vld [vmem:[#allocation6 + $0x98] sm:$0xff]
    %v536 = vld [vmem:[#allocation6 + $0xb0] sm:$0xff]
    %v537 = vld [vmem:[#allocation6 + $0xb8] sm:$0xff]
    %v538 = vld [vmem:[#allocation6 + $0xd0] sm:$0xff]
    %v539 = vld [vmem:[#allocation6 + $0xd8] sm:$0xff]
    %v540 = vld [vmem:[#allocation6 + $0xf0] sm:$0xff]
    %v541 = vld [vmem:[#allocation6 + $0xf8] sm:$0xff]
    %v542 = vld [vmem:[#allocation6 + $0x110] sm:$0xff]
    %v543 = vld [vmem:[#allocation6 + $0x118] sm:$0xff]
    %v544 = vld [vmem:[#allocation6 + $0x130] sm:$0xff]
    %v545 = vld [vmem:[#allocation6 + $0x138] sm:$0xff]
    %v546 = vld [vmem:[#allocation6 + $0x150] sm:$0xff]
    %v547 = vld [vmem:[#allocation6 + $0x158] sm:$0xff]
    %v548 = vld [vmem:[#allocation6 + $0x170] sm:$0xff]
    %v549 = vld [vmem:[#allocation6 + $0x178] sm:$0xff]
    %v550 = vld [vmem:[#allocation6 + $0x190] sm:$0xff]
    %v551 = vld [vmem:[#allocation6 + $0x198] sm:$0xff]
    %v552 = vld [vmem:[#allocation6 + $0x1b0] sm:$0xff]
    %v553 = vld [vmem:[#allocation6 + $0x1b8] sm:$0xff]
    %v554 = vld [vmem:[#allocation6 + $0x1d0] sm:$0xff]
    %v555 = vld [vmem:[#allocation6 + $0x1d8] sm:$0xff]
    %v556 = vld [vmem:[#allocation6 + $0x1f0] sm:$0xff]
    %v557 = vld [vmem:[#allocation6 + $0x1f8] sm:$0xff]
    %558 = vmatprep.subr.mxu0 %v527
    %559 = vmatpush1.msra.mxu0 %v526
    %560 = vmatprep.subr.mxu0 %v529
    %561 = vmatpush1.msra.mxu0 %v528
    %562 = vmatprep.subr.mxu0 %v531
    %563 = vmatpush1.msra.mxu0 %v530
    %564 = vmatprep.subr.mxu0 %v533
    %565 = vmatpush1.msra.mxu0 %v532
    %566 = vmatprep.subr.mxu0 %v535
    %567 = vmatpush1.msra.mxu0 %v534
    %568 = vmatprep.subr.mxu0 %v537
    %569 = vmatpush1.msra.mxu0 %v536
    %570 = vmatprep.subr.mxu0 %v539
    %571 = vmatpush1.msra.mxu0 %v538
    %572 = vmatprep.subr.mxu0 %v541
    %573 = vmatpush1.msra.mxu0 %v540
    %574 = vmatprep.subr.mxu0 %v543
    %575 = vmatpush1.msra.mxu0 %v542
    %576 = vmatprep.subr.mxu0 %v545
    %577 = vmatpush1.msra.mxu0 %v544
    %578 = vmatprep.subr.mxu0 %v547
    %579 = vmatpush1.msra.mxu0 %v546
    %580 = vmatprep.subr.mxu0 %v549
    %581 = vmatpush1.msra.mxu0 %v548
    %582 = vmatprep.subr.mxu0 %v551
    %583 = vmatpush1.msra.mxu0 %v550
    %584 = vmatprep.subr.mxu0 %v553
    %585 = vmatpush1.msra.mxu0 %v552
    %586 = vmatprep.subr.mxu0 %v555
    %587 = vmatpush1.msra.mxu0 %v554
    %588 = vmatprep.subr.mxu0 %v557
    %589 = vmatpush1.msra.mxu0 %v556
    %590 = vmatprep.subr.mxu0 0.0
    %591 = vmatpush1.msra.mxu0 0.0
    %592 = vmatprep.subr.mxu0 0.0
    %593 = vmatpush1.msra.mxu0 0.0
    %594 = vmatprep.subr.mxu0 0.0
    %595 = vmatpush1.msra.mxu0 0.0
    %596 = vmatprep.subr.mxu0 0.0
    %597 = vmatpush1.msra.mxu0 0.0
    %598 = vmatprep.subr.mxu0 0.0
    %599 = vmatpush1.msra.mxu0 0.0
    %600 = vmatprep.subr.mxu0 0.0
    %601 = vmatpush1.msra.mxu0 0.0
    %602 = vmatprep.subr.mxu0 0.0
    %603 = vmatpush1.msra.mxu0 0.0
    %604 = vmatprep.subr.mxu0 0.0
    %605 = vmatpush1.msra.mxu0 0.0
    %606 = vmatprep.subr.mxu0 0.0
    %607 = vmatpush1.msra.mxu0 0.0
    %608 = vmatprep.subr.mxu0 0.0
    %609 = vmatpush1.msra.mxu0 0.0
    %610 = vmatprep.subr.mxu0 0.0
    %611 = vmatpush1.msra.mxu0 0.0
    %612 = vmatprep.subr.mxu0 0.0
    %613 = vmatpush1.msra.mxu0 0.0
    %614 = vmatprep.subr.mxu0 0.0
    %615 = vmatpush1.msra.mxu0 0.0
    %616 = vmatprep.subr.mxu0 0.0
    %617 = vmatpush1.msra.mxu0 0.0
    %618 = vmatprep.subr.mxu0 0.0
    %619 = vmatpush1.msra.mxu0 0.0
    %620 = vmatprep.subr.mxu0 0.0
    %621 = vmatpush1.msra.mxu0 0.0
    %622 = vmatprep.mubr.f32.mxu0 0.0
    %623 = vmatmul.mubr.f32.gmra.mrb[0].mxu0 %v64
    %v624 = vpop.f32.mrb[0].mxu0
    %v625 = vadd.f32 0.0, %v624
    %v626 = vpop.f32.mrb[0].mxu0
    %v627 = vadd.f32 0.0, %v626
    %628 = vmatprep.mubr.f32.mxu0 0.0
    %629 = vmatmul.mubr.f32.gmra.mrb[0].mxu0 %v65
    %v630 = vpop.f32.mrb[0].mxu0
    %v631 = vadd.f32 0.0, %v630
    %v632 = vpop.f32.mrb[0].mxu0
    %v633 = vadd.f32 0.0, %v632
    %634 = vmatprep.mubr.f32.mxu0 0.0
    %635 = vmatmul.mubr.f32.gmra.mrb[0].mxu0 %v66
    %v636 = vpop.f32.mrb[0].mxu0
    %v637 = vadd.f32 0.0, %v636
    %v638 = vpop.f32.mrb[0].mxu0
    %v639 = vadd.f32 0.0, %v638
    %640 = vmatprep.mubr.f32.mxu0 0.0
    %641 = vmatmul.mubr.f32.gmra.mrb[0].mxu0 %v67
    %v642 = vpop.f32.mrb[0].mxu0
    %v643 = vadd.f32 0.0, %v642
    %v644 = vpop.f32.mrb[0].mxu0
    %v645 = vadd.f32 0.0, %v644
    %646 = vdwg.mxu0
    %v647 = vmul.f32 %v625, 0.5
    %v648 = vmul.f32 %v627, 0.5
    %v649 = vmul.f32 %v631, 0.5
    %v650 = vmul.f32 %v633, 0.5
    %v651 = vmul.f32 %v637, 0.5
    %v652 = vmul.f32 %v639, 0.5
    %v653 = vmul.f32 %v643, 0.5
    %v654 = vmul.f32 %v645, 0.5
    %v655 = vmul.f32 %v625, 0.70710677
    %v656 = vmul.f32 %v627, 0.70710677
    %v657 = vmul.f32 %v631, 0.70710677
    %v658 = vmul.f32 %v633, 0.70710677
    %v659 = vmul.f32 %v637, 0.70710677
    %v660 = vmul.f32 %v639, 0.70710677
    %v661 = vmul.f32 %v643, 0.70710677
    %v662 = vmul.f32 %v645, 0.70710677
    %vm663 = vcmp.ge.f32.partialorder %v655, 0.0
    %vm664 = vcmp.ge.f32.partialorder %v656, 0.0
    %vm665 = vcmp.ge.f32.partialorder %v657, 0.0
    %vm666 = vcmp.ge.f32.partialorder %v658, 0.0
    %vm667 = vcmp.ge.f32.partialorder %v659, 0.0
    %vm668 = vcmp.ge.f32.partialorder %v660, 0.0
    %vm669 = vcmp.ge.f32.partialorder %v661, 0.0
    %vm670 = vcmp.ge.f32.partialorder %v662, 0.0
    %v671 = vsel %vm663, 1.0, -1.0
    %v672 = vsel %vm664, 1.0, -1.0
    %v673 = vsel %vm665, 1.0, -1.0
    %v674 = vsel %vm666, 1.0, -1.0
    %v675 = vsel %vm667, 1.0, -1.0
    %v676 = vsel %vm668, 1.0, -1.0
    %v677 = vsel %vm669, 1.0, -1.0
    %v678 = vsel %vm670, 1.0, -1.0
    %v679 = vand.u32 2147483647, %v655
    %v680 = vand.u32 2147483647, %v656
    %v681 = vand.u32 2147483647, %v657
    %v682 = vand.u32 2147483647, %v658
    %v683 = vand.u32 2147483647, %v659
    %v684 = vand.u32 2147483647, %v660
    %v685 = vand.u32 2147483647, %v661
    %v686 = vand.u32 2147483647, %v662
    %v687 = vmul.f32 %v679, 0.3275911
    %v688 = vmul.f32 %v680, 0.3275911
    %v689 = vmul.f32 %v681, 0.3275911
    %v690 = vmul.f32 %v682, 0.3275911
    %v691 = vmul.f32 %v683, 0.3275911
    %v692 = vmul.f32 %v684, 0.3275911
    %v693 = vmul.f32 %v685, 0.3275911
    %v694 = vmul.f32 %v686, 0.3275911
    %v695 = vadd.f32 %v687, 1.0
    %v696 = vadd.f32 %v688, 1.0
    %v697 = vadd.f32 %v689, 1.0
    %v698 = vadd.f32 %v690, 1.0
    %v699 = vadd.f32 %v691, 1.0
    %v700 = vadd.f32 %v692, 1.0
    %v701 = vadd.f32 %v693, 1.0
    %v702 = vadd.f32 %v694, 1.0
    %v703 = vrcp.pop %v695
    %v704 = vrcp.pop %v696
    %v705 = vrcp.pop %v697
    %v706 = vrcp.pop %v698
    %v707 = vrcp.pop %v699
    %v708 = vrcp.pop %v700
    %v709 = vrcp.pop %v701
    %v710 = vrcp.pop %v702
    %v711 = vmul.f32 %v703, 1.0614054
    %v712 = vmul.f32 %v704, 1.0614054
    %v713 = vmul.f32 %v705, 1.0614054
    %v714 = vmul.f32 %v706, 1.0614054
    %v715 = vmul.f32 %v707, 1.0614054
    %v716 = vmul.f32 %v708, 1.0614054
    %v717 = vmul.f32 %v709, 1.0614054
    %v718 = vmul.f32 %v710, 1.0614054
    %v719 = vadd.f32 %v711, -1.4531521
    %v720 = vadd.f32 %v712, -1.4531521
    %v721 = vadd.f32 %v713, -1.4531521
    %v722 = vadd.f32 %v714, -1.4531521
    %v723 = vadd.f32 %v715, -1.4531521
    %v724 = vadd.f32 %v716, -1.4531521
    %v725 = vadd.f32 %v717, -1.4531521
    %v726 = vadd.f32 %v718, -1.4531521
    %v727 = vmul.f32 %v719, %v703
    %v728 = vmul.f32 %v720, %v704
    %v729 = vmul.f32 %v721, %v705
    %v730 = vmul.f32 %v722, %v706
    %v731 = vmul.f32 %v723, %v707
    %v732 = vmul.f32 %v724, %v708
    %v733 = vmul.f32 %v725, %v709
    %v734 = vmul.f32 %v726, %v710
    %v735 = vadd.f32 %v727, 1.4214138
    %v736 = vadd.f32 %v728, 1.4214138
    %v737 = vadd.f32 %v729, 1.4214138
    %v738 = vadd.f32 %v730, 1.4214138
    %v739 = vadd.f32 %v731, 1.4214138
    %v740 = vadd.f32 %v732, 1.4214138
    %v741 = vadd.f32 %v733, 1.4214138
    %v742 = vadd.f32 %v734, 1.4214138
    %v743 = vmul.f32 %v735, %v703
    %v744 = vmul.f32 %v736, %v704
    %v745 = vmul.f32 %v737, %v705
    %v746 = vmul.f32 %v738, %v706
    %v747 = vmul.f32 %v739, %v707
    %v748 = vmul.f32 %v740, %v708
    %v749 = vmul.f32 %v741, %v709
    %v750 = vmul.f32 %v742, %v710
    %v751 = vadd.f32 %v743, -0.28449672
    %v752 = vadd.f32 %v744, -0.28449672
    %v753 = vadd.f32 %v745, -0.28449672
    %v754 = vadd.f32 %v746, -0.28449672
    %v755 = vadd.f32 %v747, -0.28449672
    %v756 = vadd.f32 %v748, -0.28449672
    %v757 = vadd.f32 %v749, -0.28449672
    %v758 = vadd.f32 %v750, -0.28449672
    %v759 = vmul.f32 %v751, %v703
    %v760 = vmul.f32 %v752, %v704
    %v761 = vmul.f32 %v753, %v705
    %v762 = vmul.f32 %v754, %v706
    %v763 = vmul.f32 %v755, %v707
    %v764 = vmul.f32 %v756, %v708
    %v765 = vmul.f32 %v757, %v709
    %v766 = vmul.f32 %v758, %v710
    %v767 = vadd.f32 %v759, 0.2548296
    %v768 = vadd.f32 %v760, 0.2548296
    %v769 = vadd.f32 %v761, 0.2548296
    %v770 = vadd.f32 %v762, 0.2548296
    %v771 = vadd.f32 %v763, 0.2548296
    %v772 = vadd.f32 %v764, 0.2548296
    %v773 = vadd.f32 %v765, 0.2548296
    %v774 = vadd.f32 %v766, 0.2548296
    %v775 = vmul.f32 %v767, %v703
    %v776 = vmul.f32 %v768, %v704
    %v777 = vmul.f32 %v769, %v705
    %v778 = vmul.f32 %v770, %v706
    %v779 = vmul.f32 %v771, %v707
    %v780 = vmul.f32 %v772, %v708
    %v781 = vmul.f32 %v773, %v709
    %v782 = vmul.f32 %v774, %v710
    %v783 = vsub.f32 0.0, %v679
    %v784 = vsub.f32 0.0, %v680
    %v785 = vsub.f32 0.0, %v681
    %v786 = vsub.f32 0.0, %v682
    %v787 = vsub.f32 0.0, %v683
    %v788 = vsub.f32 0.0, %v684
    %v789 = vsub.f32 0.0, %v685
    %v790 = vsub.f32 0.0, %v686
    %v791 = vmul.f32 %v783, %v679
    %v792 = vmul.f32 %v784, %v680
    %v793 = vmul.f32 %v785, %v681
    %v794 = vmul.f32 %v786, %v682
    %v795 = vmul.f32 %v787, %v683
    %v796 = vmul.f32 %v788, %v684
    %v797 = vmul.f32 %v789, %v685
    %v798 = vmul.f32 %v790, %v686
    %v799 = vmul.f32 %v791, 1.442695
    %v800 = vpow.pop %v799
    %v801 = vmul.f32 %v792, 1.442695
    %v802 = vpow.pop %v801
    %v803 = vmul.f32 %v793, 1.442695
    %v804 = vpow.pop %v803
    %v805 = vmul.f32 %v794, 1.442695
    %v806 = vpow.pop %v805
    %v807 = vmul.f32 %v795, 1.442695
    %v808 = vpow.pop %v807
    %v809 = vmul.f32 %v796, 1.442695
    %v810 = vpow.pop %v809
    %v811 = vmul.f32 %v797, 1.442695
    %v812 = vpow.pop %v811
    %v813 = vmul.f32 %v798, 1.442695
    %v814 = vpow.pop %v813
    %v815 = vmul.f32 %v775, %v800
    %v816 = vmul.f32 %v776, %v802
    %v817 = vmul.f32 %v777, %v804
    %v818 = vmul.f32 %v778, %v806
    %v819 = vmul.f32 %v779, %v808
    %v820 = vmul.f32 %v780, %v810
    %v821 = vmul.f32 %v781, %v812
    %v822 = vmul.f32 %v782, %v814
    %v823 = vsub.f32 1.0, %v815
    %v824 = vsub.f32 1.0, %v816
    %v825 = vsub.f32 1.0, %v817
    %v826 = vsub.f32 1.0, %v818
    %v827 = vsub.f32 1.0, %v819
    %v828 = vsub.f32 1.0, %v820
    %v829 = vsub.f32 1.0, %v821
    %v830 = vsub.f32 1.0, %v822
    %v831 = vmul.f32 %v671, %v823
    %v832 = vmul.f32 %v672, %v824
    %v833 = vmul.f32 %v673, %v825
    %v834 = vmul.f32 %v674, %v826
    %v835 = vmul.f32 %v675, %v827
    %v836 = vmul.f32 %v676, %v828
    %v837 = vmul.f32 %v677, %v829
    %v838 = vmul.f32 %v678, %v830
    %v839 = vadd.f32 %v831, 1.0
    %v840 = vadd.f32 %v832, 1.0
    %v841 = vadd.f32 %v833, 1.0
    %v842 = vadd.f32 %v834, 1.0
    %v843 = vadd.f32 %v835, 1.0
    %v844 = vadd.f32 %v836, 1.0
    %v845 = vadd.f32 %v837, 1.0
    %v846 = vadd.f32 %v838, 1.0
    %v847 = vmul.f32 %v647, %v839
    %v848 = vmul.f32 %v648, %v840
    %v849 = vmul.f32 %v649, %v841
    %v850 = vmul.f32 %v650, %v842
    %v851 = vmul.f32 %v651, %v843
    %v852 = vmul.f32 %v652, %v844
    %v853 = vmul.f32 %v653, %v845
    %v854 = vmul.f32 %v654, %v846
    %v855 = vld [vmem:[#allocation2] sm:$0xff]
    %v856 = vld [vmem:[#allocation2 + $0x8] sm:$0xff]
    %v857 = vld [vmem:[#allocation2 + $0x10] sm:$0xff]
    %v858 = vld [vmem:[#allocation2 + $0x18] sm:$0xff]
    %v859 = vld [vmem:[#allocation8 + $0x100] sm:$0xff]
    %v860 = vld [vmem:[#allocation8 + $0x108] sm:$0xff]
    %v861 = vld [vmem:[#allocation8 + $0x110] sm:$0xff]
    %v862 = vld [vmem:[#allocation8 + $0x118] sm:$0xff]
    %v863 = vld [vmem:[#allocation8 + $0x120] sm:$0xff]
    %v864 = vld [vmem:[#allocation8 + $0x128] sm:$0xff]
    %v865 = vld [vmem:[#allocation8 + $0x130] sm:$0xff]
    %v866 = vld [vmem:[#allocation8 + $0x138] sm:$0xff]
    %v867 = vld [vmem:[#allocation8 + $0x140] sm:$0xff]
    %v868 = vld [vmem:[#allocation8 + $0x148] sm:$0xff]
    %v869 = vld [vmem:[#allocation8 + $0x150] sm:$0xff]
    %v870 = vld [vmem:[#allocation8 + $0x158] sm:$0xff]
    %v871 = vld [vmem:[#allocation8 + $0x160] sm:$0xff]
    %v872 = vld [vmem:[#allocation8 + $0x168] sm:$0xff]
    %v873 = vld [vmem:[#allocation8 + $0x170] sm:$0xff]
    %v874 = vld [vmem:[#allocation8 + $0x178] sm:$0xff]
    %v875 = vld [vmem:[#allocation8 + $0x180] sm:$0xff]
    %v876 = vld [vmem:[#allocation8 + $0x188] sm:$0xff]
    %v877 = vld [vmem:[#allocation8 + $0x190] sm:$0xff]
    %v878 = vld [vmem:[#allocation8 + $0x198] sm:$0xff]
    %v879 = vld [vmem:[#allocation8 + $0x1a0] sm:$0xff]
    %v880 = vld [vmem:[#allocation8 + $0x1a8] sm:$0xff]
    %v881 = vld [vmem:[#allocation8 + $0x1b0] sm:$0xff]
    %v882 = vld [vmem:[#allocation8 + $0x1b8] sm:$0xff]
    %v883 = vld [vmem:[#allocation8 + $0x1c0] sm:$0xff]
    %v884 = vld [vmem:[#allocation8 + $0x1c8] sm:$0xff]
    %v885 = vld [vmem:[#allocation8 + $0x1d0] sm:$0xff]
    %v886 = vld [vmem:[#allocation8 + $0x1d8] sm:$0xff]
    %v887 = vld [vmem:[#allocation8 + $0x1e0] sm:$0xff]
    %v888 = vld [vmem:[#allocation8 + $0x1e8] sm:$0xff]
    %v889 = vld [vmem:[#allocation8 + $0x1f0] sm:$0xff]
    %v890 = vld [vmem:[#allocation8 + $0x1f8] sm:$0xff]
    %891 = vmatprep.subr.mxu0 0.0
    %892 = vmatpush1.msra.mxu0 %v859
    %893 = vmatprep.subr.mxu0 0.0
    %894 = vmatpush1.msra.mxu0 %v860
    %895 = vmatprep.subr.mxu0 0.0
    %896 = vmatpush1.msra.mxu0 %v861
    %897 = vmatprep.subr.mxu0 0.0
    %898 = vmatpush1.msra.mxu0 %v862
    %899 = vmatprep.subr.mxu0 0.0
    %900 = vmatpush1.msra.mxu0 %v863
    %901 = vmatprep.subr.mxu0 0.0
    %902 = vmatpush1.msra.mxu0 %v864
    %903 = vmatprep.subr.mxu0 0.0
    %904 = vmatpush1.msra.mxu0 %v865
    %905 = vmatprep.subr.mxu0 0.0
    %906 = vmatpush1.msra.mxu0 %v866
    %907 = vmatprep.subr.mxu0 0.0
    %908 = vmatpush1.msra.mxu0 %v867
    %909 = vmatprep.subr.mxu0 0.0
    %910 = vmatpush1.msra.mxu0 %v868
    %911 = vmatprep.subr.mxu0 0.0
    %912 = vmatpush1.msra.mxu0 %v869
    %913 = vmatprep.subr.mxu0 0.0
    %914 = vmatpush1.msra.mxu0 %v870
    %915 = vmatprep.subr.mxu0 0.0
    %916 = vmatpush1.msra.mxu0 %v871
    %917 = vmatprep.subr.mxu0 0.0
    %918 = vmatpush1.msra.mxu0 %v872
    %919 = vmatprep.subr.mxu0 0.0
    %920 = vmatpush1.msra.mxu0 %v873
    %921 = vmatprep.subr.mxu0 0.0
    %922 = vmatpush1.msra.mxu0 %v874
    %923 = vmatprep.subr.mxu0 0.0
    %924 = vmatpush1.msra.mxu0 %v875
    %925 = vmatprep.subr.mxu0 0.0
    %926 = vmatpush1.msra.mxu0 %v876
    %927 = vmatprep.subr.mxu0 0.0
    %928 = vmatpush1.msra.mxu0 %v877
    %929 = vmatprep.subr.mxu0 0.0
    %930 = vmatpush1.msra.mxu0 %v878
    %931 = vmatprep.subr.mxu0 0.0
    %932 = vmatpush1.msra.mxu0 %v879
    %933 = vmatprep.subr.mxu0 0.0
    %934 = vmatpush1.msra.mxu0 %v880
    %935 = vmatprep.subr.mxu0 0.0
    %936 = vmatpush1.msra.mxu0 %v881
    %937 = vmatprep.subr.mxu0 0.0
    %938 = vmatpush1.msra.mxu0 %v882
    %939 = vmatprep.subr.mxu0 0.0
    %940 = vmatpush1.msra.mxu0 %v883
    %941 = vmatprep.subr.mxu0 0.0
    %942 = vmatpush1.msra.mxu0 %v884
    %943 = vmatprep.subr.mxu0 0.0
    %944 = vmatpush1.msra.mxu0 %v885
    %945 = vmatprep.subr.mxu0 0.0
    %946 = vmatpush1.msra.mxu0 %v886
    %947 = vmatprep.subr.mxu0 0.0
    %948 = vmatpush1.msra.mxu0 %v887
    %949 = vmatprep.subr.mxu0 0.0
    %950 = vmatpush1.msra.mxu0 %v888
    %951 = vmatprep.subr.mxu0 0.0
    %952 = vmatpush1.msra.mxu0 %v889
    %953 = vmatprep.subr.mxu0 0.0
    %954 = vmatpush1.msra.mxu0 %v890
    %955 = vmatprep.mubr.f32.mxu0 %v848
    %956 = vmatmul.mubr.f32.gmra.mrb[0].mxu0 %v847
    %v957 = vpop.f32.mrb[0].mxu0
    %v958 = vadd.f32 0.0, %v957
    %v959 = vpop.f32.mrb[0].mxu0
    %960 = vmatprep.mubr.f32.mxu0 %v850
    %961 = vmatmul.mubr.f32.gmra.mrb[0].mxu0 %v849
    %v962 = vpop.f32.mrb[0].mxu0
    %v963 = vadd.f32 0.0, %v962
    %v964 = vpop.f32.mrb[0].mxu0
    %965 = vmatprep.mubr.f32.mxu0 %v852
    %966 = vmatmul.mubr.f32.gmra.mrb[0].mxu0 %v851
    %v967 = vpop.f32.mrb[0].mxu0
    %v968 = vadd.f32 0.0, %v967
    %v969 = vpop.f32.mrb[0].mxu0
    %970 = vmatprep.mubr.f32.mxu0 %v854
    %971 = vmatmul.mubr.f32.gmra.mrb[0].mxu0 %v853
    %v972 = vpop.f32.mrb[0].mxu0
    %v973 = vadd.f32 0.0, %v972
    %v974 = vpop.f32.mrb[0].mxu0
    %975 = vdwg.mxu0
    %v976 = vadd.f32 %v855, %v958
    %v977 = vadd.f32 %v856, %v963
    %v978 = vadd.f32 %v857, %v968
    %v979 = vadd.f32 %v858, %v973
    %980 = vst [vmem:[#allocation2] sm:$0xff] %v976
    %981 = vst [vmem:[#allocation2 + $0x8] sm:$0xff] %v977
    %982 = vst [vmem:[#allocation2 + $0x10] sm:$0xff] %v978
    %983 = vst [vmem:[#allocation2 + $0x18] sm:$0xff] %v979
    // Predicated region
    $region30: #{tpu_custom_call.1} parent=1 // pred_check
      %p984 = pneg %p56
    $region31: #{tpu_custom_call.1} parent=1 // pred_check_branch
      %986 = sbr.rel (%p984) target = $region33
    $region32: #{tpu_custom_call.1} parent=1 // pred_region
      %v987 = vld [vmem:[#allocation2] sm:$0xff]
      %v988 = vld [vmem:[#allocation2 + $0x8] sm:$0xff]
      %v989 = vld [vmem:[#allocation2 + $0x10] sm:$0xff]
      %v990 = vld [vmem:[#allocation2 + $0x18] sm:$0xff]
      %991 = vst [vmem:[#allocation9] sm:$0xff] %v987
      %992 = vst [vmem:[#allocation9 + $0x8] sm:$0xff] %v988
      %993 = vst [vmem:[#allocation9 + $0x10] sm:$0xff] %v989
      %994 = vst [vmem:[#allocation9 + $0x18] sm:$0xff] %v990
    $region33: #{tpu_custom_call.1} parent=1 // pred_fallthru
      _
    // Predicated region
    $region34: #{tpu_custom_call.1} parent=1 // pred_check
      _
    $region35: #{tpu_custom_call.1} parent=1 // pred_check_branch
      %996 = sbr.rel (0) target = $region37
    $region36: #{tpu_custom_call.1} parent=1 // pred_region
      %s998 = ssub.s32 512, 512
      %999 = vsyncadd [#allocation5], %s998
      %s1000 = sshll.u32 [#allocation9], 4
      %s1001 = int_to_ptr.vmem [resolvable:$true] %s1000
      %1006 = dma.vmem_to_hbm [thread:$0]  %s1001, 512, %s3, [#allocation5], 128, 128, 8
    $region37: #{tpu_custom_call.1} parent=1 // pred_fallthru
      _
    // Predicated region
    $region38: #{tpu_custom_call.1} parent=1 // pred_check
      _
    $region39: #{tpu_custom_call.1} parent=1 // pred_check_branch
      %1008 = sbr.rel (0) target = $region41
    $region40: #{tpu_custom_call.1} parent=1 // pred_region
      %1009 = dma.done [#allocation5], 512
    $region41: #{tpu_custom_call.1} parent=1 // pred_fallthru
      _
    %1010 = vsyncpa [#allocation4], 1
    %1011 = vsyncpa [#allocation7], 1
    %1012 = vsyncpa [#allocation5], 1

// kernel: tpu_custom_call.1
$region0: #{tpu_custom_call.1}
  #allocation0 [shape = 'u32[]', space=smem, size = 0x4, offset = 0x4, fixed_abs, tag = 'smem constant byte address 0x4 - core index']
  #allocation1 [shape = 'u32[144,128]{1,0:T(1,128)}', space=vmem, size = 0x12000, scoped, tag = 'internal scratch']
  #allocation2 [shape = 'f32[32,128]{1,0:T(8,128)}', space=vmem, size = 0x4000, scoped, tag = 'scratch operand']
  %s0 = inlined_call_operand.hbm [shape: f32[32,128], index: 0, kind: input, shape index: {}]
  %s1 = inlined_call_operand.hbm [shape: f32[128,512], index: 1, kind: input, shape index: {}]
  %s2 = inlined_call_operand.hbm [shape: f32[512,128], index: 2, kind: input, shape index: {}]
  %s3 = inlined_call_operand.hbm [shape: f32[32,128], index: 3, kind: output, shape index: {}]
  %s4 = sld [smem:[#allocation0]]
  $region42: #{tpu_custom_call.1} parent=0
    _
  %s6 = ssub.s32 1, %s4
  %s7 = scalar_select 0, %s6, %s4
  $region1: #{tpu_custom_call.1} parent=0
    #allocation3 [shape = 'u8[16384]{0}', space=vmem, size = 0x4000, scoped, tag = 'input window, operand 0, single buffered']
    #allocation4 [shape = 's32[1]{0}', space=sflag, size = 0x4, scoped, tag = 'scoped memory for tpu_custom_call.1']
    #allocation5 [shape = 's32[1]{0}', space=sflag, size = 0x4, scoped, tag = 'scoped memory for tpu_custom_call.1']
    #allocation6 [shape = 'u8[262144]{0}', space=vmem, size = 0x40000, scoped, tag = 'input window, operand 1, single buffered']
    #allocation7 [shape = 's32[1]{0}', space=sflag, size = 0x4, scoped, tag = 'scoped memory for tpu_custom_call.1']
    #allocation8 [shape = 'u8[262144]{0}', space=vmem, size = 0x40000, scoped, tag = 'input window, operand 2, single buffered']
    #allocation9 [shape = 'u8[16384]{0}', space=vmem, size = 0x4000, scoped, tag = 'output window, operand 0, single buffered']
    %8 = vsyncpa [#allocation4], 0
    %9 = vsyncpa [#allocation7], 0
    %10 = vsyncpa [#allocation5], 0
    // Predicated region
    $region2: #{tpu_custom_call.1} parent=1 // pred_check
      _
    $region3: #{tpu_custom_call.1} parent=1 // pred_check_branch
      %12 = sbr.rel (0) target = $region5
    $region4: #{tpu_custom_call.1} parent=1 // pred_region
      %s14 = ssub.s32 512, 512
      %15 = vsyncadd [#allocation4], %s14
      %s16 = sshll.u32 [#allocation3], 4
      %s17 = int_to_ptr.vmem [resolvable:$true] %s16
      %22 = dma.hbm_to_vmem [thread:$0]  %s0, 512, %s17, [#allocation4], 128, 128, 8
    $region5: #{tpu_custom_call.1} parent=1 // pred_fallthru
      _
    // Predicated region
    $region6: #{tpu_custom_call.1} parent=1 // pred_check
      _
    $region7: #{tpu_custom_call.1} parent=1 // pred_check_branch
      %24 = sbr.rel (0) target = $region9
    $region8: #{tpu_custom_call.1} parent=1 // pred_region
      %s26 = ssub.s32 8192, 8192
      %27 = vsyncadd [#allocation7], %s26
      %s28 = sshll.u32 [#allocation6], 4
      %s29 = int_to_ptr.vmem [resolvable:$true] %s28
      %34 = dma.hbm_to_vmem [thread:$0]  %s1, 8192, %s29, [#allocation7], 512, 512, 32
    $region9: #{tpu_custom_call.1} parent=1 // pred_fallthru
      _
    // Predicated region
    $region10: #{tpu_custom_call.1} parent=1 // pred_check
      _
    $region11: #{tpu_custom_call.1} parent=1 // pred_check_branch
      %36 = sbr.rel (0) target = $region13
    $region12: #{tpu_custom_call.1} parent=1 // pred_region
      %s38 = ssub.s32 8192, 8192
      %39 = vsyncadd [#allocation7], %s38
      %s40 = sshll.u32 [#allocation8], 4
      %s41 = int_to_ptr.vmem [resolvable:$true] %s40
      %46 = dma.hbm_to_vmem [thread:$0]  %s2, 8192, %s41, [#allocation7], 128, 128, 8
    $region13: #{tpu_custom_call.1} parent=1 // pred_fallthru
      _
    // Predicated region
    $region14: #{tpu_custom_call.1} parent=1 // pred_check
      _
    $region15: #{tpu_custom_call.1} parent=1 // pred_check_branch
      %48 = sbr.rel (0) target = $region17
    $region16: #{tpu_custom_call.1} parent=1 // pred_region
      %49 = dma.done [#allocation4], 512
    $region17: #{tpu_custom_call.1} parent=1 // pred_fallthru
      _
    // Predicated region
    $region18: #{tpu_custom_call.1} parent=1 // pred_check
      _
    $region19: #{tpu_custom_call.1} parent=1 // pred_check_branch
      %51 = sbr.rel (0) target = $region21
    $region20: #{tpu_custom_call.1} parent=1 // pred_region
      %52 = dma.done [#allocation7], 8192
    $region21: #{tpu_custom_call.1} parent=1 // pred_fallthru
      _
    // Predicated region
    $region22: #{tpu_custom_call.1} parent=1 // pred_check
      _
    $region23: #{tpu_custom_call.1} parent=1 // pred_check_branch
      %54 = sbr.rel (0) target = $region25
    $region24: #{tpu_custom_call.1} parent=1 // pred_region
      %55 = dma.done [#allocation7], 8192
    $region25: #{tpu_custom_call.1} parent=1 // pred_fallthru
      _
    %p56 = scmp.eq.s32.totalorder 0, 0
    // Predicated region
    $region26: #{tpu_custom_call.1} parent=1 // pred_check
      %p57 = pneg %p56
    $region27: #{tpu_custom_call.1} parent=1 // pred_check_branch
      %59 = sbr.rel (%p57) target = $region29
    $region28: #{tpu_custom_call.1} parent=1 // pred_region
      %60 = vst [vmem:[#allocation2] sm:$0xff] 0.0
      %61 = vst [vmem:[#allocation2 + $0x8] sm:$0xff] 0.0
      %62 = vst [vmem:[#allocation2 + $0x10] sm:$0xff] 0.0
      %63 = vst [vmem:[#allocation2 + $0x18] sm:$0xff] 0.0
    $region29: #{tpu_custom_call.1} parent=1 // pred_fallthru
      _
    %v64 = vld [vmem:[#allocation3] sm:$0xff]
    %v65 = vld [vmem:[#allocation3 + $0x8] sm:$0xff]
    %v66 = vld [vmem:[#allocation3 + $0x10] sm:$0xff]
    %v67 = vld [vmem:[#allocation3 + $0x18] sm:$0xff]
    %v68 = vld [vmem:[#allocation6] sm:$0xff]
    %v69 = vld [vmem:[#allocation6 + $0x8] sm:$0xff]
    %v70 = vld [vmem:[#allocation6 + $0x20] sm:$0xff]
    %v71 = vld [vmem:[#allocation6 + $0x28] sm:$0xff]
    %v72 = vld [vmem:[#allocation6 + $0x40] sm:$0xff]
    %v73 = vld [vmem:[#allocation6 + $0x48] sm:$0xff]
    %v74 = vld [vmem:[#allocation6 + $0x60] sm:$0xff]
    %v75 = vld [vmem:[#allocation6 + $0x68] sm:$0xff]
    %v76 = vld [vmem:[#allocation6 + $0x80] sm:$0xff]
    %v77 = vld [vmem:[#allocation6 + $0x88] sm:$0xff]
    %v78 = vld [vmem:[#allocation6 + $0xa0] sm:$0xff]
    %v79 = vld [vmem:[#allocation6 + $0xa8] sm:$0xff]
    %v80 = vld [vmem:[#allocation6 + $0xc0] sm:$0xff]
    %v81 = vld [vmem:[#allocation6 + $0xc8] sm:$0xff]
    %v82 = vld [vmem:[#allocation6 + $0xe0] sm:$0xff]
    %v83 = vld [vmem:[#allocation6 + $0xe8] sm:$0xff]
    %v84 = vld [vmem:[#allocation6 + $0x100] sm:$0xff]
    %v85 = vld [vmem:[#allocation6 + $0x108] sm:$0xff]
    %v86 = vld [vmem:[#allocation6 + $0x120] sm:$0xff]
    %v87 = vld [vmem:[#allocation6 + $0x128] sm:$0xff]
    %v88 = vld [vmem:[#allocation6 + $0x140] sm:$0xff]
    %v89 = vld [vmem:[#allocation6 + $0x148] sm:$0xff]
    %v90 = vld [vmem:[#allocation6 + $0x160] sm:$0xff]
    %v91 = vld [vmem:[#allocation6 + $0x168] sm:$0xff]
    %v92 = vld [vmem:[#allocation6 + $0x180] sm:$0xff]
    %v93 = vld [vmem:[#allocation6 + $0x188] sm:$0xff]
    %v94 = vld [vmem:[#allocation6 + $0x1a0] sm:$0xff]
    %v95 = vld [vmem:[#allocation6 + $0x1a8] sm:$0xff]
    %v96 = vld [vmem:[#allocation6 + $0x1c0] sm:$0xff]
    %v97 = vld [vmem:[#allocation6 + $0x1c8] sm:$0xff]
    %v98 = vld [vmem:[#allocation6 + $0x1e0] sm:$0xff]
    %v99 = vld [vmem:[#allocation6 + $0x1e8] sm:$0xff]
    %100 = vmatprep.subr.mxu0 %v69
    %101 = vmatpush1.msra.mxu0 %v68
    %102 = vmatprep.subr.mxu0 %v71
    %103 = vmatpush1.msra.mxu0 %v70
    %104 = vmatprep.subr.mxu0 %v73
    %105 = vmatpush1.msra.mxu0 %v72
    %106 = vmatprep.subr.mxu0 %v75
    %107 = vmatpush1.msra.mxu0 %v74
    %108 = vmatprep.subr.mxu0 %v77
    %109 = vmatpush1.msra.mxu0 %v76
    %110 = vmatprep.subr.mxu0 %v79
    %111 = vmatpush1.msra.mxu0 %v78
    %112 = vmatprep.subr.mxu0 %v81
    %113 = vmatpush1.msra.mxu0 %v80
    %114 = vmatprep.subr.mxu0 %v83
    %115 = vmatpush1.msra.mxu0 %v82
    %116 = vmatprep.subr.mxu0 %v85
    %117 = vmatpush1.msra.mxu0 %v84
    %118 = vmatprep.subr.mxu0 %v87
    %119 = vmatpush1.msra.mxu0 %v86
    %120 = vmatprep.subr.mxu0 %v89
    %121 = vmatpush1.msra.mxu0 %v88
    %122 = vmatprep.subr.mxu0 %v91
    %123 = vmatpush1.msra.mxu0 %v90
    %124 = vmatprep.subr.mxu0 %v93
    %125 = vmatpush1.msra.mxu0 %v92
    %126 = vmatprep.subr.mxu0 %v95
    %127 = vmatpush1.msra.mxu0 %v94
    %128 = vmatprep.subr.mxu0 %v97
    %129 = vmatpush1.msra.mxu0 %v96
    %130 = vmatprep.subr.mxu0 %v99
    %131 = vmatpush1.msra.mxu0 %v98
    %132 = vmatprep.subr.mxu0 0.0
    %133 = vmatpush1.msra.mxu0 0.0
    %134 = vmatprep.subr.mxu0 0.0
    %135 = vmatpush1.msra.mxu0 0.0
    %136 = vmatprep.subr.mxu0 0.0
    %137 = vmatpush1.msra.mxu0 0.0
    %138 = vmatprep.subr.mxu0 0.0
    %139 = vmatpush1.msra.mxu0 0.0
    %140 = vmatprep.subr.mxu0 0.0
    %141 = vmatpush1.msra.mxu0 0.0
    %142 = vmatprep.subr.mxu0 0.0
    %143 = vmatpush1.msra.mxu0 0.0
    %144 = vmatprep.subr.mxu0 0.0
    %145 = vmatpush1.msra.mxu0 0.0
    %146 = vmatprep.subr.mxu0 0.0
    %147 = vmatpush1.msra.mxu0 0.0
    %148 = vmatprep.subr.mxu0 0.0
    %149 = vmatpush1.msra.mxu0 0.0
    %150 = vmatprep.subr.mxu0 0.0
    %151 = vmatpush1.msra.mxu0 0.0
    %152 = vmatprep.subr.mxu0 0.0
    %153 = vmatpush1.msra.mxu0 0.0
    %154 = vmatprep.subr.mxu0 0.0
    %155 = vmatpush1.msra.mxu0 0.0
    %156 = vmatprep.subr.mxu0 0.0
    %157 = vmatpush1.msra.mxu0 0.0
    %158 = vmatprep.subr.mxu0 0.0
    %159 = vmatpush1.msra.mxu0 0.0
    %160 = vmatprep.subr.mxu0 0.0
    %161 = vmatpush1.msra.mxu0 0.0
    %162 = vmatprep.subr.mxu0 0.0
    %163 = vmatpush1.msra.mxu0 0.0
    %164 = vmatprep.mubr.f32.mxu0 0.0
    %165 = vmatmul.mubr.f32.gmra.mrb[0].mxu0 %v64
    %v166 = vpop.f32.mrb[0].mxu0
    %v167 = vadd.f32 0.0, %v166
    %v168 = vpop.f32.mrb[0].mxu0
    %v169 = vadd.f32 0.0, %v168
    %170 = vmatprep.mubr.f32.mxu0 0.0
    %171 = vmatmul.mubr.f32.gmra.mrb[0].mxu0 %v65
    %v172 = vpop.f32.mrb[0].mxu0
    %v173 = vadd.f32 0.0, %v172
    %v174 = vpop.f32.mrb[0].mxu0
    %v175 = vadd.f32 0.0, %v174
    %176 = vmatprep.mubr.f32.mxu0 0.0
    %177 = vmatmul.mubr.f32.gmra.mrb[0].mxu0 %v66
    %v178 = vpop.f32.mrb[0].mxu0
    %v179 = vadd.f32 0.0, %v178
    %v180 = vpop.f32.mrb[0].mxu0
    %v181 = vadd.f32 0.0, %v180
    %182 = vmatprep.mubr.f32.mxu0 0.0
    %183 = vmatmul.mubr.f32.gmra.mrb[0].mxu0 %v67
    %v184 = vpop.f32.mrb[0].mxu0
    %v185 = vadd.f32 0.0, %v184
    %v186 = vpop.f32.mrb[0].mxu0
    %v187 = vadd.f32 0.0, %v186
    %188 = vdwg.mxu0
    %v189 = vmul.f32 %v167, 0.5
    %v190 = vmul.f32 %v169, 0.5
    %v191 = vmul.f32 %v173, 0.5
    %v192 = vmul.f32 %v175, 0.5
    %v193 = vmul.f32 %v179, 0.5
    %v194 = vmul.f32 %v181, 0.5
    %v195 = vmul.f32 %v185, 0.5
    %v196 = vmul.f32 %v187, 0.5
    %v197 = vmul.f32 %v167, 0.70710677
    %v198 = vmul.f32 %v169, 0.70710677
    %v199 = vmul.f32 %v173, 0.70710677
    %v200 = vmul.f32 %v175, 0.70710677
    %v201 = vmul.f32 %v179, 0.70710677
    %v202 = vmul.f32 %v181, 0.70710677
    %v203 = vmul.f32 %v185, 0.70710677
    %v204 = vmul.f32 %v187, 0.70710677
    %vm205 = vcmp.ge.f32.partialorder %v197, 0.0
    %vm206 = vcmp.ge.f32.partialorder %v198, 0.0
    %vm207 = vcmp.ge.f32.partialorder %v199, 0.0
    %vm208 = vcmp.ge.f32.partialorder %v200, 0.0
    %vm209 = vcmp.ge.f32.partialorder %v201, 0.0
    %vm210 = vcmp.ge.f32.partialorder %v202, 0.0
    %vm211 = vcmp.ge.f32.partialorder %v203, 0.0
    %vm212 = vcmp.ge.f32.partialorder %v204, 0.0
    %v213 = vsel %vm205, 1.0, -1.0
    %v214 = vsel %vm206, 1.0, -1.0
    %v215 = vsel %vm207, 1.0, -1.0
    %v216 = vsel %vm208, 1.0, -1.0
    %v217 = vsel %vm209, 1.0, -1.0
    %v218 = vsel %vm210, 1.0, -1.0
    %v219 = vsel %vm211, 1.0, -1.0
    %v220 = vsel %vm212, 1.0, -1.0
    %v221 = vand.u32 2147483647, %v197
    %v222 = vand.u32 2147483647, %v198
    %v223 = vand.u32 2147483647, %v199
    %v224 = vand.u32 2147483647, %v200
    %v225 = vand.u32 2147483647, %v201
    %v226 = vand.u32 2147483647, %v202
    %v227 = vand.u32 2147483647, %v203
    %v228 = vand.u32 2147483647, %v204
    %v229 = vmul.f32 %v221, 0.3275911
    %v230 = vmul.f32 %v222, 0.3275911
    %v231 = vmul.f32 %v223, 0.3275911
    %v232 = vmul.f32 %v224, 0.3275911
    %v233 = vmul.f32 %v225, 0.3275911
    %v234 = vmul.f32 %v226, 0.3275911
    %v235 = vmul.f32 %v227, 0.3275911
    %v236 = vmul.f32 %v228, 0.3275911
    %v237 = vadd.f32 %v229, 1.0
    %v238 = vadd.f32 %v230, 1.0
    %v239 = vadd.f32 %v231, 1.0
    %v240 = vadd.f32 %v232, 1.0
    %v241 = vadd.f32 %v233, 1.0
    %v242 = vadd.f32 %v234, 1.0
    %v243 = vadd.f32 %v235, 1.0
    %v244 = vadd.f32 %v236, 1.0
    %v245 = vrcp.pop %v237
    %v246 = vrcp.pop %v238
    %v247 = vrcp.pop %v239
    %v248 = vrcp.pop %v240
    %v249 = vrcp.pop %v241
    %v250 = vrcp.pop %v242
    %v251 = vrcp.pop %v243
    %v252 = vrcp.pop %v244
    %v253 = vmul.f32 %v245, 1.0614054
    %v254 = vmul.f32 %v246, 1.0614054
    %v255 = vmul.f32 %v247, 1.0614054
    %v256 = vmul.f32 %v248, 1.0614054
    %v257 = vmul.f32 %v249, 1.0614054
    %v258 = vmul.f32 %v250, 1.0614054
    %v259 = vmul.f32 %v251, 1.0614054
    %v260 = vmul.f32 %v252, 1.0614054
    %v261 = vadd.f32 %v253, -1.4531521
    %v262 = vadd.f32 %v254, -1.4531521
    %v263 = vadd.f32 %v255, -1.4531521
    %v264 = vadd.f32 %v256, -1.4531521
    %v265 = vadd.f32 %v257, -1.4531521
    %v266 = vadd.f32 %v258, -1.4531521
    %v267 = vadd.f32 %v259, -1.4531521
    %v268 = vadd.f32 %v260, -1.4531521
    %v269 = vmul.f32 %v261, %v245
    %v270 = vmul.f32 %v262, %v246
    %v271 = vmul.f32 %v263, %v247
    %v272 = vmul.f32 %v264, %v248
    %v273 = vmul.f32 %v265, %v249
    %v274 = vmul.f32 %v266, %v250
    %v275 = vmul.f32 %v267, %v251
    %v276 = vmul.f32 %v268, %v252
    %v277 = vadd.f32 %v269, 1.4214138
    %v278 = vadd.f32 %v270, 1.4214138
    %v279 = vadd.f32 %v271, 1.4214138
    %v280 = vadd.f32 %v272, 1.4214138
    %v281 = vadd.f32 %v273, 1.4214138
    %v282 = vadd.f32 %v274, 1.4214138
    %v283 = vadd.f32 %v275, 1.4214138
    %v284 = vadd.f32 %v276, 1.4214138
    %v285 = vmul.f32 %v277, %v245
    %v286 = vmul.f32 %v278, %v246
    %v287 = vmul.f32 %v279, %v247
    %v288 = vmul.f32 %v280, %v248
    %v289 = vmul.f32 %v281, %v249
    %v290 = vmul.f32 %v282, %v250
    %v291 = vmul.f32 %v283, %v251
    %v292 = vmul.f32 %v284, %v252
    %v293 = vadd.f32 %v285, -0.28449672
    %v294 = vadd.f32 %v286, -0.28449672
    %v295 = vadd.f32 %v287, -0.28449672
    %v296 = vadd.f32 %v288, -0.28449672
    %v297 = vadd.f32 %v289, -0.28449672
    %v298 = vadd.f32 %v290, -0.28449672
    %v299 = vadd.f32 %v291, -0.28449672
    %v300 = vadd.f32 %v292, -0.28449672
    %v301 = vmul.f32 %v293, %v245
    %v302 = vmul.f32 %v294, %v246
    %v303 = vmul.f32 %v295, %v247
    %v304 = vmul.f32 %v296, %v248
    %v305 = vmul.f32 %v297, %v249
    %v306 = vmul.f32 %v298, %v250
    %v307 = vmul.f32 %v299, %v251
    %v308 = vmul.f32 %v300, %v252
    %v309 = vadd.f32 %v301, 0.2548296
    %v310 = vadd.f32 %v302, 0.2548296
    %v311 = vadd.f32 %v303, 0.2548296
    %v312 = vadd.f32 %v304, 0.2548296
    %v313 = vadd.f32 %v305, 0.2548296
    %v314 = vadd.f32 %v306, 0.2548296
    %v315 = vadd.f32 %v307, 0.2548296
    %v316 = vadd.f32 %v308, 0.2548296
    %v317 = vmul.f32 %v309, %v245
    %v318 = vmul.f32 %v310, %v246
    %v319 = vmul.f32 %v311, %v247
    %v320 = vmul.f32 %v312, %v248
    %v321 = vmul.f32 %v313, %v249
    %v322 = vmul.f32 %v314, %v250
    %v323 = vmul.f32 %v315, %v251
    %v324 = vmul.f32 %v316, %v252
    %v325 = vsub.f32 0.0, %v221
    %v326 = vsub.f32 0.0, %v222
    %v327 = vsub.f32 0.0, %v223
    %v328 = vsub.f32 0.0, %v224
    %v329 = vsub.f32 0.0, %v225
    %v330 = vsub.f32 0.0, %v226
    %v331 = vsub.f32 0.0, %v227
    %v332 = vsub.f32 0.0, %v228
    %v333 = vmul.f32 %v325, %v221
    %v334 = vmul.f32 %v326, %v222
    %v335 = vmul.f32 %v327, %v223
    %v336 = vmul.f32 %v328, %v224
    %v337 = vmul.f32 %v329, %v225
    %v338 = vmul.f32 %v330, %v226
    %v339 = vmul.f32 %v331, %v227
    %v340 = vmul.f32 %v332, %v228
    %v341 = vmul.f32 %v333, 1.442695
    %v342 = vpow.pop %v341
    %v343 = vmul.f32 %v334, 1.442695
    %v344 = vpow.pop %v343
    %v345 = vmul.f32 %v335, 1.442695
    %v346 = vpow.pop %v345
    %v347 = vmul.f32 %v336, 1.442695
    %v348 = vpow.pop %v347
    %v349 = vmul.f32 %v337, 1.442695
    %v350 = vpow.pop %v349
    %v351 = vmul.f32 %v338, 1.442695
    %v352 = vpow.pop %v351
    %v353 = vmul.f32 %v339, 1.442695
    %v354 = vpow.pop %v353
    %v355 = vmul.f32 %v340, 1.442695
    %v356 = vpow.pop %v355
    %v357 = vmul.f32 %v317, %v342
    %v358 = vmul.f32 %v318, %v344
    %v359 = vmul.f32 %v319, %v346
    %v360 = vmul.f32 %v320, %v348
    %v361 = vmul.f32 %v321, %v350
    %v362 = vmul.f32 %v322, %v352
    %v363 = vmul.f32 %v323, %v354
    %v364 = vmul.f32 %v324, %v356
    %v365 = vsub.f32 1.0, %v357
    %v366 = vsub.f32 1.0, %v358
    %v367 = vsub.f32 1.0, %v359
    %v368 = vsub.f32 1.0, %v360
    %v369 = vsub.f32 1.0, %v361
    %v370 = vsub.f32 1.0, %v362
    %v371 = vsub.f32 1.0, %v363
    %v372 = vsub.f32 1.0, %v364
    %v373 = vmul.f32 %v213, %v365
    %v374 = vmul.f32 %v214, %v366
    %v375 = vmul.f32 %v215, %v367
    %v376 = vmul.f32 %v216, %v368
    %v377 = vmul.f32 %v217, %v369
    %v378 = vmul.f32 %v218, %v370
    %v379 = vmul.f32 %v219, %v371
    %v380 = vmul.f32 %v220, %v372
    %v381 = vadd.f32 %v373, 1.0
    %v382 = vadd.f32 %v374, 1.0
    %v383 = vadd.f32 %v375, 1.0
    %v384 = vadd.f32 %v376, 1.0
    %v385 = vadd.f32 %v377, 1.0
    %v386 = vadd.f32 %v378, 1.0
    %v387 = vadd.f32 %v379, 1.0
    %v388 = vadd.f32 %v380, 1.0
    %v389 = vmul.f32 %v189, %v381
    %v390 = vmul.f32 %v190, %v382
    %v391 = vmul.f32 %v191, %v383
    %v392 = vmul.f32 %v192, %v384
    %v393 = vmul.f32 %v193, %v385
    %v394 = vmul.f32 %v194, %v386
    %v395 = vmul.f32 %v195, %v387
    %v396 = vmul.f32 %v196, %v388
    %v397 = vld [vmem:[#allocation2] sm:$0xff]
    %v398 = vld [vmem:[#allocation2 + $0x8] sm:$0xff]
    %v399 = vld [vmem:[#allocation2 + $0x10] sm:$0xff]
    %v400 = vld [vmem:[#allocation2 + $0x18] sm:$0xff]
    %v401 = vld [vmem:[#allocation8] sm:$0xff]
    %v402 = vld [vmem:[#allocation8 + $0x8] sm:$0xff]
    %v403 = vld [vmem:[#allocation8 + $0x10] sm:$0xff]
    %v404 = vld [vmem:[#allocation8 + $0x18] sm:$0xff]
    %v405 = vld [vmem:[#allocation8 + $0x20] sm:$0xff]
    %v406 = vld [vmem:[#allocation8 + $0x28] sm:$0xff]
    %v407 = vld [vmem:[#allocation8 + $0x30] sm:$0xff]
    %v408 = vld [vmem:[#allocation8 + $0x38] sm:$0xff]
    %v409 = vld [vmem:[#allocation8 + $0x40] sm:$0xff]
    %v410 = vld [vmem:[#allocation8 + $0x48] sm:$0xff]
    %v411 = vld [vmem:[#allocation8 + $0x50] sm:$0xff]
    %v412 = vld [vmem:[#allocation8 + $0x58] sm:$0xff]
    %v413 = vld [vmem:[#allocation8 + $0x60] sm:$0xff]
    %v414 = vld [vmem:[#allocation8 + $0x68] sm:$0xff]
    %v415 = vld [vmem:[#allocation8 + $0x70] sm:$0xff]
    %v416 = vld [vmem:[#allocation8 + $0x78] sm:$0xff]
    %v417 = vld [vmem:[#allocation8 + $0x80] sm:$0xff]
    %v418 = vld [vmem:[#allocation8 + $0x88] sm:$0xff]
    %v419 = vld [vmem:[#allocation8 + $0x90] sm:$0xff]
    %v420 = vld [vmem:[#allocation8 + $0x98] sm:$0xff]
    %v421 = vld [vmem:[#allocation8 + $0xa0] sm:$0xff]
    %v422 = vld [vmem:[#allocation8 + $0xa8] sm:$0xff]
    %v423 = vld [vmem:[#allocation8 + $0xb0] sm:$0xff]
    %v424 = vld [vmem:[#allocation8 + $0xb8] sm:$0xff]
    %v425 = vld [vmem:[#allocation8 + $0xc0] sm:$0xff]
    %v426 = vld [vmem:[#allocation8 + $0xc8] sm:$0xff]
    %v427 = vld [vmem:[#allocation8 + $0xd0] sm:$0xff]
    %v428 = vld [vmem:[#allocation8 + $0xd8] sm:$0xff]
    %v429 = vld [vmem:[#allocation8 + $0xe0] sm:$0xff]
    %v430 = vld [vmem:[#allocation8 + $0xe8] sm:$0xff]
    %v431 = vld [vmem:[#allocation8 + $0xf0] sm:$0xff]
    %v432 = vld [vmem:[#allocation8 + $0xf8] sm:$0xff]
    %433 = vmatprep.subr.mxu0 0.0
    %434 = vmatpush1.msra.mxu0 %v401
    %435 = vmatprep.subr.mxu0 0.0
    %436 = vmatpush1.msra.mxu0 %v402
    %437 = vmatprep.subr.mxu0 0.0
    %438 = vmatpush1.msra.mxu0 %v403
    %439 = vmatprep.subr.mxu0 0.0
    %440 = vmatpush1.msra.mxu0 %v404
    %441 = vmatprep.subr.mxu0 0.0
    %442 = vmatpush1.msra.mxu0 %v405
    %443 = vmatprep.subr.mxu0 0.0
    %444 = vmatpush1.msra.mxu0 %v406
    %445 = vmatprep.subr.mxu0 0.0
    %446 = vmatpush1.msra.mxu0 %v407
    %447 = vmatprep.subr.mxu0 0.0
    %448 = vmatpush1.msra.mxu0 %v408
    %449 = vmatprep.subr.mxu0 0.0
    %450 = vmatpush1.msra.mxu0 %v409
    %451 = vmatprep.subr.mxu0 0.0
    %452 = vmatpush1.msra.mxu0 %v410
    %453 = vmatprep.subr.mxu0 0.0
    %454 = vmatpush1.msra.mxu0 %v411
    %455 = vmatprep.subr.mxu0 0.0
    %456 = vmatpush1.msra.mxu0 %v412
    %457 = vmatprep.subr.mxu0 0.0
    %458 = vmatpush1.msra.mxu0 %v413
    %459 = vmatprep.subr.mxu0 0.0
    %460 = vmatpush1.msra.mxu0 %v414
    %461 = vmatprep.subr.mxu0 0.0
    %462 = vmatpush1.msra.mxu0 %v415
    %463 = vmatprep.subr.mxu0 0.0
    %464 = vmatpush1.msra.mxu0 %v416
    %465 = vmatprep.subr.mxu0 0.0
    %466 = vmatpush1.msra.mxu0 %v417
    %467 = vmatprep.subr.mxu0 0.0
    %468 = vmatpush1.msra.mxu0 %v418
    %469 = vmatprep.subr.mxu0 0.0
    %470 = vmatpush1.msra.mxu0 %v419
    %471 = vmatprep.subr.mxu0 0.0
    %472 = vmatpush1.msra.mxu0 %v420
    %473 = vmatprep.subr.mxu0 0.0
    %474 = vmatpush1.msra.mxu0 %v421
    %475 = vmatprep.subr.mxu0 0.0
    %476 = vmatpush1.msra.mxu0 %v422
    %477 = vmatprep.subr.mxu0 0.0
    %478 = vmatpush1.msra.mxu0 %v423
    %479 = vmatprep.subr.mxu0 0.0
    %480 = vmatpush1.msra.mxu0 %v424
    %481 = vmatprep.subr.mxu0 0.0
    %482 = vmatpush1.msra.mxu0 %v425
    %483 = vmatprep.subr.mxu0 0.0
    %484 = vmatpush1.msra.mxu0 %v426
    %485 = vmatprep.subr.mxu0 0.0
    %486 = vmatpush1.msra.mxu0 %v427
    %487 = vmatprep.subr.mxu0 0.0
    %488 = vmatpush1.msra.mxu0 %v428
    %489 = vmatprep.subr.mxu0 0.0
    %490 = vmatpush1.msra.mxu0 %v429
    %491 = vmatprep.subr.mxu0 0.0
    %492 = vmatpush1.msra.mxu0 %v430
    %493 = vmatprep.subr.mxu0 0.0
    %494 = vmatpush1.msra.mxu0 %v431
    %495 = vmatprep.subr.mxu0 0.0
    %496 = vmatpush1.msra.mxu0 %v432
    %497 = vmatprep.mubr.f32.mxu0 %v390
    %498 = vmatmul.mubr.f32.gmra.mrb[0].mxu0 %v389
    %v499 = vpop.f32.mrb[0].mxu0
    %v500 = vadd.f32 0.0, %v499
    %v501 = vpop.f32.mrb[0].mxu0
    %502 = vmatprep.mubr.f32.mxu0 %v392
    %503 = vmatmul.mubr.f32.gmra.mrb[0].mxu0 %v391
    %v504 = vpop.f32.mrb[0].mxu0
    %v505 = vadd.f32 0.0, %v504
    %v506 = vpop.f32.mrb[0].mxu0
    %507 = vmatprep.mubr.f32.mxu0 %v394
    %508 = vmatmul.mubr.f32.gmra.mrb[0].mxu0 %v393
    %v509 = vpop.f32.mrb[0].mxu0
    %v510 = vadd.f32 0.0, %v509
    %v511 = vpop.f32.mrb[0].mxu0
    %512 = vmatprep.mubr.f32.mxu0 %v396
    %513 = vmatmul.mubr.f32.gmra.mrb[0].mxu0 %v395
    %v514 = vpop.f32.mrb[0].mxu0
    %v515 = vadd.f32 0.0, %v514
    %v516 = vpop.f32.mrb[0].mxu0
    %517 = vdwg.mxu0
    %v518 = vadd.f32 %v397, %v500
    %v519 = vadd.f32 %v398, %v505
    %v520 = vadd.f32 %v399, %v510
    %v521 = vadd.f32 %v400, %v515
    %522 = vst [vmem:[#allocation2] sm:$0xff] %v518
    %523 = vst [vmem:[#allocation2 + $0x8] sm:$0xff] %v519
    %524 = vst [vmem:[#allocation2 + $0x10] sm:$0xff] %v520
    %525 = vst [vmem:[#allocation2 + $0x18] sm:$0xff] %v521
    %v526 = vld [vmem:[#allocation6 + $0x10] sm:$0xff]
    %v527 = vld [vmem:[#allocation6 + $0x18] sm:$0xff]
    %v528 = vld [vmem:[#allocation6 + $0x30] sm:$0xff]
    %v529 = vld [vmem:[#allocation6 + $0x38] sm:$0xff]
    %v530 = vld [vmem:[#allocation6 + $0x50] sm:$0xff]
    %v531 = vld [vmem:[#allocation6 + $0x58] sm:$0xff]
    %v532 = vld [vmem:[#allocation6 + $0x70] sm:$0xff]
    %v533 = vld [vmem:[#allocation6 + $0x78] sm:$0xff]
    %v534 = vld [vmem:[#allocation6 + $0x90] sm:$0xff]
    %v535 = vld [vmem:[#allocation6 + $0x98] sm:$0xff]
    %v536 = vld [vmem:[#allocation6 + $0xb0] sm:$0xff]
    %v537 = vld [vmem:[#allocation6 + $0xb8] sm:$0xff]
    %v538 = vld [vmem:[#allocation6 + $0xd0] sm:$0xff]
    %v539 = vld [vmem:[#allocation6 + $0xd8] sm:$0xff]
    %v540 = vld [vmem:[#allocation6 + $0xf0] sm:$0xff]
    %v541 = vld [vmem:[#allocation6 + $0xf8] sm:$0xff]
    %v542 = vld [vmem:[#allocation6 + $0x110] sm:$0xff]
    %v543 = vld [vmem:[#allocation6 + $0x118] sm:$0xff]
    %v544 = vld [vmem:[#allocation6 + $0x130] sm:$0xff]
    %v545 = vld [vmem:[#allocation6 + $0x138] sm:$0xff]
    %v546 = vld [vmem:[#allocation6 + $0x150] sm:$0xff]
    %v547 = vld [vmem:[#allocation6 + $0x158] sm:$0xff]
    %v548 = vld [vmem:[#allocation6 + $0x170] sm:$0xff]
    %v549 = vld [vmem:[#allocation6 + $0x178] sm:$0xff]
    %v550 = vld [vmem:[#allocation6 + $0x190] sm:$0xff]
    %v551 = vld [vmem:[#allocation6 + $0x198] sm:$0xff]
    %v552 = vld [vmem:[#allocation6 + $0x1b0] sm:$0xff]
    %v553 = vld [vmem:[#allocation6 + $0x1b8] sm:$0xff]
    %v554 = vld [vmem:[#allocation6 + $0x1d0] sm:$0xff]
    %v555 = vld [vmem:[#allocation6 + $0x1d8] sm:$0xff]
    %v556 = vld [vmem:[#allocation6 + $0x1f0] sm:$0xff]
    %v557 = vld [vmem:[#allocation6 + $0x1f8] sm:$0xff]
    %558 = vmatprep.subr.mxu0 %v527
    %559 = vmatpush1.msra.mxu0 %v526
    %560 = vmatprep.subr.mxu0 %v529
    %561 = vmatpush1.msra.mxu0 %v528
    %562 = vmatprep.subr.mxu0 %v531
    %563 = vmatpush1.msra.mxu0 %v530
    %564 = vmatprep.subr.mxu0 %v533
    %565 = vmatpush1.msra.mxu0 %v532
    %566 = vmatprep.subr.mxu0 %v535
    %567 = vmatpush1.msra.mxu0 %v534
    %568 = vmatprep.subr.mxu0 %v537
    %569 = vmatpush1.msra.mxu0 %v536
    %570 = vmatprep.subr.mxu0 %v539
    %571 = vmatpush1.msra.mxu0 %v538
    %572 = vmatprep.subr.mxu0 %v541
    %573 = vmatpush1.msra.mxu0 %v540
    %574 = vmatprep.subr.mxu0 %v543
    %575 = vmatpush1.msra.mxu0 %v542
    %576 = vmatprep.subr.mxu0 %v545
    %577 = vmatpush1.msra.mxu0 %v544
    %578 = vmatprep.subr.mxu0 %v547
    %579 = vmatpush1.msra.mxu0 %v546
    %580 = vmatprep.subr.mxu0 %v549
    %581 = vmatpush1.msra.mxu0 %v548
    %582 = vmatprep.subr.mxu0 %v551
    %583 = vmatpush1.msra.mxu0 %v550
    %584 = vmatprep.subr.mxu0 %v553
    %585 = vmatpush1.msra.mxu0 %v552
    %586 = vmatprep.subr.mxu0 %v555
    %587 = vmatpush1.msra.mxu0 %v554
    %588 = vmatprep.subr.mxu0 %v557
    %589 = vmatpush1.msra.mxu0 %v556
    %590 = vmatprep.subr.mxu0 0.0
    %591 = vmatpush1.msra.mxu0 0.0
    %592 = vmatprep.subr.mxu0 0.0
    %593 = vmatpush1.msra.mxu0 0.0
    %594 = vmatprep.subr.mxu0 0.0
    %595 = vmatpush1.msra.mxu0 0.0
    %596 = vmatprep.subr.mxu0 0.0
    %597 = vmatpush1.msra.mxu0 0.0
    %598 = vmatprep.subr.mxu0 0.0
    %599 = vmatpush1.msra.mxu0 0.0
    %600 = vmatprep.subr.mxu0 0.0
    %601 = vmatpush1.msra.mxu0 0.0
    %602 = vmatprep.subr.mxu0 0.0
    %603 = vmatpush1.msra.mxu0 0.0
    %604 = vmatprep.subr.mxu0 0.0
    %605 = vmatpush1.msra.mxu0 0.0
    %606 = vmatprep.subr.mxu0 0.0
    %607 = vmatpush1.msra.mxu0 0.0
    %608 = vmatprep.subr.mxu0 0.0
    %609 = vmatpush1.msra.mxu0 0.0
    %610 = vmatprep.subr.mxu0 0.0
    %611 = vmatpush1.msra.mxu0 0.0
    %612 = vmatprep.subr.mxu0 0.0
    %613 = vmatpush1.msra.mxu0 0.0
    %614 = vmatprep.subr.mxu0 0.0
    %615 = vmatpush1.msra.mxu0 0.0
    %616 = vmatprep.subr.mxu0 0.0
    %617 = vmatpush1.msra.mxu0 0.0
    %618 = vmatprep.subr.mxu0 0.0
    %619 = vmatpush1.msra.mxu0 0.0
    %620 = vmatprep.subr.mxu0 0.0
    %621 = vmatpush1.msra.mxu0 0.0
    %622 = vmatprep.mubr.f32.mxu0 0.0
    %623 = vmatmul.mubr.f32.gmra.mrb[0].mxu0 %v64
    %v624 = vpop.f32.mrb[0].mxu0
    %v625 = vadd.f32 0.0, %v624
    %v626 = vpop.f32.mrb[0].mxu0
    %v627 = vadd.f32 0.0, %v626
    %628 = vmatprep.mubr.f32.mxu0 0.0
    %629 = vmatmul.mubr.f32.gmra.mrb[0].mxu0 %v65
    %v630 = vpop.f32.mrb[0].mxu0
    %v631 = vadd.f32 0.0, %v630
    %v632 = vpop.f32.mrb[0].mxu0
    %v633 = vadd.f32 0.0, %v632
    %634 = vmatprep.mubr.f32.mxu0 0.0
    %635 = vmatmul.mubr.f32.gmra.mrb[0].mxu0 %v66
    %v636 = vpop.f32.mrb[0].mxu0
    %v637 = vadd.f32 0.0, %v636
    %v638 = vpop.f32.mrb[0].mxu0
    %v639 = vadd.f32 0.0, %v638
    %640 = vmatprep.mubr.f32.mxu0 0.0
    %641 = vmatmul.mubr.f32.gmra.mrb[0].mxu0 %v67
    %v642 = vpop.f32.mrb[0].mxu0
    %v643 = vadd.f32 0.0, %v642
    %v644 = vpop.f32.mrb[0].mxu0
    %v645 = vadd.f32 0.0, %v644
    %646 = vdwg.mxu0
    %v647 = vmul.f32 %v625, 0.5
    %v648 = vmul.f32 %v627, 0.5
    %v649 = vmul.f32 %v631, 0.5
    %v650 = vmul.f32 %v633, 0.5
    %v651 = vmul.f32 %v637, 0.5
    %v652 = vmul.f32 %v639, 0.5
    %v653 = vmul.f32 %v643, 0.5
    %v654 = vmul.f32 %v645, 0.5
    %v655 = vmul.f32 %v625, 0.70710677
    %v656 = vmul.f32 %v627, 0.70710677
    %v657 = vmul.f32 %v631, 0.70710677
    %v658 = vmul.f32 %v633, 0.70710677
    %v659 = vmul.f32 %v637, 0.70710677
    %v660 = vmul.f32 %v639, 0.70710677
    %v661 = vmul.f32 %v643, 0.70710677
    %v662 = vmul.f32 %v645, 0.70710677
    %vm663 = vcmp.ge.f32.partialorder %v655, 0.0
    %vm664 = vcmp.ge.f32.partialorder %v656, 0.0
    %vm665 = vcmp.ge.f32.partialorder %v657, 0.0
    %vm666 = vcmp.ge.f32.partialorder %v658, 0.0
    %vm667 = vcmp.ge.f32.partialorder %v659, 0.0
    %vm668 = vcmp.ge.f32.partialorder %v660, 0.0
    %vm669 = vcmp.ge.f32.partialorder %v661, 0.0
    %vm670 = vcmp.ge.f32.partialorder %v662, 0.0
    %v671 = vsel %vm663, 1.0, -1.0
    %v672 = vsel %vm664, 1.0, -1.0
    %v673 = vsel %vm665, 1.0, -1.0
    %v674 = vsel %vm666, 1.0, -1.0
    %v675 = vsel %vm667, 1.0, -1.0
    %v676 = vsel %vm668, 1.0, -1.0
    %v677 = vsel %vm669, 1.0, -1.0
    %v678 = vsel %vm670, 1.0, -1.0
    %v679 = vand.u32 2147483647, %v655
    %v680 = vand.u32 2147483647, %v656
    %v681 = vand.u32 2147483647, %v657
    %v682 = vand.u32 2147483647, %v658
    %v683 = vand.u32 2147483647, %v659
    %v684 = vand.u32 2147483647, %v660
    %v685 = vand.u32 2147483647, %v661
    %v686 = vand.u32 2147483647, %v662
    %v687 = vmul.f32 %v679, 0.3275911
    %v688 = vmul.f32 %v680, 0.3275911
    %v689 = vmul.f32 %v681, 0.3275911
    %v690 = vmul.f32 %v682, 0.3275911
    %v691 = vmul.f32 %v683, 0.3275911
    %v692 = vmul.f32 %v684, 0.3275911
    %v693 = vmul.f32 %v685, 0.3275911
    %v694 = vmul.f32 %v686, 0.3275911
    %v695 = vadd.f32 %v687, 1.0
    %v696 = vadd.f32 %v688, 1.0
    %v697 = vadd.f32 %v689, 1.0
    %v698 = vadd.f32 %v690, 1.0
    %v699 = vadd.f32 %v691, 1.0
    %v700 = vadd.f32 %v692, 1.0
    %v701 = vadd.f32 %v693, 1.0
    %v702 = vadd.f32 %v694, 1.0
    %v703 = vrcp.pop %v695
    %v704 = vrcp.pop %v696
    %v705 = vrcp.pop %v697
    %v706 = vrcp.pop %v698
    %v707 = vrcp.pop %v699
    %v708 = vrcp.pop %v700
    %v709 = vrcp.pop %v701
    %v710 = vrcp.pop %v702
    %v711 = vmul.f32 %v703, 1.0614054
    %v712 = vmul.f32 %v704, 1.0614054
    %v713 = vmul.f32 %v705, 1.0614054
    %v714 = vmul.f32 %v706, 1.0614054
    %v715 = vmul.f32 %v707, 1.0614054
    %v716 = vmul.f32 %v708, 1.0614054
    %v717 = vmul.f32 %v709, 1.0614054
    %v718 = vmul.f32 %v710, 1.0614054
    %v719 = vadd.f32 %v711, -1.4531521
    %v720 = vadd.f32 %v712, -1.4531521
    %v721 = vadd.f32 %v713, -1.4531521
    %v722 = vadd.f32 %v714, -1.4531521
    %v723 = vadd.f32 %v715, -1.4531521
    %v724 = vadd.f32 %v716, -1.4531521
    %v725 = vadd.f32 %v717, -1.4531521
    %v726 = vadd.f32 %v718, -1.4531521
    %v727 = vmul.f32 %v719, %v703
    %v728 = vmul.f32 %v720, %v704
    %v729 = vmul.f32 %v721, %v705
    %v730 = vmul.f32 %v722, %v706
    %v731 = vmul.f32 %v723, %v707
    %v732 = vmul.f32 %v724, %v708
    %v733 = vmul.f32 %v725, %v709
    %v734 = vmul.f32 %v726, %v710
    %v735 = vadd.f32 %v727, 1.4214138
    %v736 = vadd.f32 %v728, 1.4214138
    %v737 = vadd.f32 %v729, 1.4214138
    %v738 = vadd.f32 %v730, 1.4214138
    %v739 = vadd.f32 %v731, 1.4214138
    %v740 = vadd.f32 %v732, 1.4214138
    %v741 = vadd.f32 %v733, 1.4214138
    %v742 = vadd.f32 %v734, 1.4214138
    %v743 = vmul.f32 %v735, %v703
    %v744 = vmul.f32 %v736, %v704
    %v745 = vmul.f32 %v737, %v705
    %v746 = vmul.f32 %v738, %v706
    %v747 = vmul.f32 %v739, %v707
    %v748 = vmul.f32 %v740, %v708
    %v749 = vmul.f32 %v741, %v709
    %v750 = vmul.f32 %v742, %v710
    %v751 = vadd.f32 %v743, -0.28449672
    %v752 = vadd.f32 %v744, -0.28449672
    %v753 = vadd.f32 %v745, -0.28449672
    %v754 = vadd.f32 %v746, -0.28449672
    %v755 = vadd.f32 %v747, -0.28449672
    %v756 = vadd.f32 %v748, -0.28449672
    %v757 = vadd.f32 %v749, -0.28449672
    %v758 = vadd.f32 %v750, -0.28449672
    %v759 = vmul.f32 %v751, %v703
    %v760 = vmul.f32 %v752, %v704
    %v761 = vmul.f32 %v753, %v705
    %v762 = vmul.f32 %v754, %v706
    %v763 = vmul.f32 %v755, %v707
    %v764 = vmul.f32 %v756, %v708
    %v765 = vmul.f32 %v757, %v709
    %v766 = vmul.f32 %v758, %v710
    %v767 = vadd.f32 %v759, 0.2548296
    %v768 = vadd.f32 %v760, 0.2548296
    %v769 = vadd.f32 %v761, 0.2548296
    %v770 = vadd.f32 %v762, 0.2548296
    %v771 = vadd.f32 %v763, 0.2548296
    %v772 = vadd.f32 %v764, 0.2548296
    %v773 = vadd.f32 %v765, 0.2548296
    %v774 = vadd.f32 %v766, 0.2548296
    %v775 = vmul.f32 %v767, %v703
    %v776 = vmul.f32 %v768, %v704
    %v777 = vmul.f32 %v769, %v705
    %v778 = vmul.f32 %v770, %v706
    %v779 = vmul.f32 %v771, %v707
    %v780 = vmul.f32 %v772, %v708
    %v781 = vmul.f32 %v773, %v709
    %v782 = vmul.f32 %v774, %v710
    %v783 = vsub.f32 0.0, %v679
    %v784 = vsub.f32 0.0, %v680
    %v785 = vsub.f32 0.0, %v681
    %v786 = vsub.f32 0.0, %v682
    %v787 = vsub.f32 0.0, %v683
    %v788 = vsub.f32 0.0, %v684
    %v789 = vsub.f32 0.0, %v685
    %v790 = vsub.f32 0.0, %v686
    %v791 = vmul.f32 %v783, %v679
    %v792 = vmul.f32 %v784, %v680
    %v793 = vmul.f32 %v785, %v681
    %v794 = vmul.f32 %v786, %v682
    %v795 = vmul.f32 %v787, %v683
    %v796 = vmul.f32 %v788, %v684
    %v797 = vmul.f32 %v789, %v685
    %v798 = vmul.f32 %v790, %v686
    %v799 = vmul.f32 %v791, 1.442695
    %v800 = vpow.pop %v799
    %v801 = vmul.f32 %v792, 1.442695
    %v802 = vpow.pop %v801
    %v803 = vmul.f32 %v793, 1.442695
    %v804 = vpow.pop %v803
    %v805 = vmul.f32 %v794, 1.442695
    %v806 = vpow.pop %v805
    %v807 = vmul.f32 %v795, 1.442695
    %v808 = vpow.pop %v807
    %v809 = vmul.f32 %v796, 1.442695
    %v810 = vpow.pop %v809
    %v811 = vmul.f32 %v797, 1.442695
    %v812 = vpow.pop %v811
    %v813 = vmul.f32 %v798, 1.442695
    %v814 = vpow.pop %v813
    %v815 = vmul.f32 %v775, %v800
    %v816 = vmul.f32 %v776, %v802
    %v817 = vmul.f32 %v777, %v804
    %v818 = vmul.f32 %v778, %v806
    %v819 = vmul.f32 %v779, %v808
    %v820 = vmul.f32 %v780, %v810
    %v821 = vmul.f32 %v781, %v812
    %v822 = vmul.f32 %v782, %v814
    %v823 = vsub.f32 1.0, %v815
    %v824 = vsub.f32 1.0, %v816
    %v825 = vsub.f32 1.0, %v817
    %v826 = vsub.f32 1.0, %v818
    %v827 = vsub.f32 1.0, %v819
    %v828 = vsub.f32 1.0, %v820
    %v829 = vsub.f32 1.0, %v821
    %v830 = vsub.f32 1.0, %v822
    %v831 = vmul.f32 %v671, %v823
    %v832 = vmul.f32 %v672, %v824
    %v833 = vmul.f32 %v673, %v825
    %v834 = vmul.f32 %v674, %v826
    %v835 = vmul.f32 %v675, %v827
    %v836 = vmul.f32 %v676, %v828
    %v837 = vmul.f32 %v677, %v829
    %v838 = vmul.f32 %v678, %v830
    %v839 = vadd.f32 %v831, 1.0
    %v840 = vadd.f32 %v832, 1.0
    %v841 = vadd.f32 %v833, 1.0
    %v842 = vadd.f32 %v834, 1.0
    %v843 = vadd.f32 %v835, 1.0
    %v844 = vadd.f32 %v836, 1.0
    %v845 = vadd.f32 %v837, 1.0
    %v846 = vadd.f32 %v838, 1.0
    %v847 = vmul.f32 %v647, %v839
    %v848 = vmul.f32 %v648, %v840
    %v849 = vmul.f32 %v649, %v841
    %v850 = vmul.f32 %v650, %v842
    %v851 = vmul.f32 %v651, %v843
    %v852 = vmul.f32 %v652, %v844
    %v853 = vmul.f32 %v653, %v845
    %v854 = vmul.f32 %v654, %v846
    %v855 = vld [vmem:[#allocation2] sm:$0xff]
    %v856 = vld [vmem:[#allocation2 + $0x8] sm:$0xff]
    %v857 = vld [vmem:[#allocation2 + $0x10] sm:$0xff]
    %v858 = vld [vmem:[#allocation2 + $0x18] sm:$0xff]
    %v859 = vld [vmem:[#allocation8 + $0x100] sm:$0xff]
    %v860 = vld [vmem:[#allocation8 + $0x108] sm:$0xff]
    %v861 = vld [vmem:[#allocation8 + $0x110] sm:$0xff]
    %v862 = vld [vmem:[#allocation8 + $0x118] sm:$0xff]
    %v863 = vld [vmem:[#allocation8 + $0x120] sm:$0xff]
    %v864 = vld [vmem:[#allocation8 + $0x128] sm:$0xff]
    %v865 = vld [vmem:[#allocation8 + $0x130] sm:$0xff]
    %v866 = vld [vmem:[#allocation8 + $0x138] sm:$0xff]
    %v867 = vld [vmem:[#allocation8 + $0x140] sm:$0xff]
    %v868 = vld [vmem:[#allocation8 + $0x148] sm:$0xff]
    %v869 = vld [vmem:[#allocation8 + $0x150] sm:$0xff]
    %v870 = vld [vmem:[#allocation8 + $0x158] sm:$0xff]
    %v871 = vld [vmem:[#allocation8 + $0x160] sm:$0xff]
    %v872 = vld [vmem:[#allocation8 + $0x168] sm:$0xff]
    %v873 = vld [vmem:[#allocation8 + $0x170] sm:$0xff]
    %v874 = vld [vmem:[#allocation8 + $0x178] sm:$0xff]
    %v875 = vld [vmem:[#allocation8 + $0x180] sm:$0xff]
    %v876 = vld [vmem:[#allocation8 + $0x188] sm:$0xff]
    %v877 = vld [vmem:[#allocation8 + $0x190] sm:$0xff]
    %v878 = vld [vmem:[#allocation8 + $0x198] sm:$0xff]
    %v879 = vld [vmem:[#allocation8 + $0x1a0] sm:$0xff]
    %v880 = vld [vmem:[#allocation8 + $0x1a8] sm:$0xff]
    %v881 = vld [vmem:[#allocation8 + $0x1b0] sm:$0xff]
    %v882 = vld [vmem:[#allocation8 + $0x1b8] sm:$0xff]
    %v883 = vld [vmem:[#allocation8 + $0x1c0] sm:$0xff]
    %v884 = vld [vmem:[#allocation8 + $0x1c8] sm:$0xff]
    %v885 = vld [vmem:[#allocation8 + $0x1d0] sm:$0xff]
    %v886 = vld [vmem:[#allocation8 + $0x1d8] sm:$0xff]
    %v887 = vld [vmem:[#allocation8 + $0x1e0] sm:$0xff]
    %v888 = vld [vmem:[#allocation8 + $0x1e8] sm:$0xff]
    %v889 = vld [vmem:[#allocation8 + $0x1f0] sm:$0xff]
    %v890 = vld [vmem:[#allocation8 + $0x1f8] sm:$0xff]
    %891 = vmatprep.subr.mxu0 0.0
    %892 = vmatpush1.msra.mxu0 %v859
    %893 = vmatprep.subr.mxu0 0.0
    %894 = vmatpush1.msra.mxu0 %v860
    %895 = vmatprep.subr.mxu0 0.0
    %896 = vmatpush1.msra.mxu0 %v861
    %897 = vmatprep.subr.mxu0 0.0
    %898 = vmatpush1.msra.mxu0 %v862
    %899 = vmatprep.subr.mxu0 0.0
    %900 = vmatpush1.msra.mxu0 %v863
    %901 = vmatprep.subr.mxu0 0.0
    %902 = vmatpush1.msra.mxu0 %v864
    %903 = vmatprep.subr.mxu0 0.0
    %904 = vmatpush1.msra.mxu0 %v865
    %905 = vmatprep.subr.mxu0 0.0
    %906 = vmatpush1.msra.mxu0 %v866
    %907 = vmatprep.subr.mxu0 0.0
    %908 = vmatpush1.msra.mxu0 %v867
    %909 = vmatprep.subr.mxu0 0.0
    %910 = vmatpush1.msra.mxu0 %v868
    %911 = vmatprep.subr.mxu0 0.0
    %912 = vmatpush1.msra.mxu0 %v869
    %913 = vmatprep.subr.mxu0 0.0
    %914 = vmatpush1.msra.mxu0 %v870
    %915 = vmatprep.subr.mxu0 0.0
    %916 = vmatpush1.msra.mxu0 %v871
    %917 = vmatprep.subr.mxu0 0.0
    %918 = vmatpush1.msra.mxu0 %v872
    %919 = vmatprep.subr.mxu0 0.0
    %920 = vmatpush1.msra.mxu0 %v873
    %921 = vmatprep.subr.mxu0 0.0
    %922 = vmatpush1.msra.mxu0 %v874
    %923 = vmatprep.subr.mxu0 0.0
    %924 = vmatpush1.msra.mxu0 %v875
    %925 = vmatprep.subr.mxu0 0.0
    %926 = vmatpush1.msra.mxu0 %v876
    %927 = vmatprep.subr.mxu0 0.0
    %928 = vmatpush1.msra.mxu0 %v877
    %929 = vmatprep.subr.mxu0 0.0
    %930 = vmatpush1.msra.mxu0 %v878
    %931 = vmatprep.subr.mxu0 0.0
    %932 = vmatpush1.msra.mxu0 %v879
    %933 = vmatprep.subr.mxu0 0.0
    %934 = vmatpush1.msra.mxu0 %v880
    %935 = vmatprep.subr.mxu0 0.0
    %936 = vmatpush1.msra.mxu0 %v881
    %937 = vmatprep.subr.mxu0 0.0
    %938 = vmatpush1.msra.mxu0 %v882
    %939 = vmatprep.subr.mxu0 0.0
    %940 = vmatpush1.msra.mxu0 %v883
    %941 = vmatprep.subr.mxu0 0.0
    %942 = vmatpush1.msra.mxu0 %v884
    %943 = vmatprep.subr.mxu0 0.0
    %944 = vmatpush1.msra.mxu0 %v885
    %945 = vmatprep.subr.mxu0 0.0
    %946 = vmatpush1.msra.mxu0 %v886
    %947 = vmatprep.subr.mxu0 0.0
    %948 = vmatpush1.msra.mxu0 %v887
    %949 = vmatprep.subr.mxu0 0.0
    %950 = vmatpush1.msra.mxu0 %v888
    %951 = vmatprep.subr.mxu0 0.0
    %952 = vmatpush1.msra.mxu0 %v889
    %953 = vmatprep.subr.mxu0 0.0
    %954 = vmatpush1.msra.mxu0 %v890
    %955 = vmatprep.mubr.f32.mxu0 %v848
    %956 = vmatmul.mubr.f32.gmra.mrb[0].mxu0 %v847
    %v957 = vpop.f32.mrb[0].mxu0
    %v958 = vadd.f32 0.0, %v957
    %v959 = vpop.f32.mrb[0].mxu0
    %960 = vmatprep.mubr.f32.mxu0 %v850
    %961 = vmatmul.mubr.f32.gmra.mrb[0].mxu0 %v849
    %v962 = vpop.f32.mrb[0].mxu0
    %v963 = vadd.f32 0.0, %v962
    %v964 = vpop.f32.mrb[0].mxu0
    %965 = vmatprep.mubr.f32.mxu0 %v852
    %966 = vmatmul.mubr.f32.gmra.mrb[0].mxu0 %v851
    %v967 = vpop.f32.mrb[0].mxu0
    %v968 = vadd.f32 0.0, %v967
    %v969 = vpop.f32.mrb[0].mxu0
    %970 = vmatprep.mubr.f32.mxu0 %v854
    %971 = vmatmul.mubr.f32.gmra.mrb[0].mxu0 %v853
    %v972 = vpop.f32.mrb[0].mxu0
    %v973 = vadd.f32 0.0, %v972
    %v974 = vpop.f32.mrb[0].mxu0
    %975 = vdwg.mxu0
    %v976 = vadd.f32 %v855, %v958
    %v977 = vadd.f32 %v856, %v963
    %v978 = vadd.f32 %v857, %v968
    %v979 = vadd.f32 %v858, %v973
    %980 = vst [vmem:[#allocation2] sm:$0xff] %v976
    %981 = vst [vmem:[#allocation2 + $0x8] sm:$0xff] %v977
    %982 = vst [vmem:[#allocation2 + $0x10] sm:$0xff] %v978
    %983 = vst [vmem:[#allocation2 + $0x18] sm:$0xff] %v979
    // Predicated region
    $region30: #{tpu_custom_call.1} parent=1 // pred_check
      %p984 = pneg %p56
    $region31: #{tpu_custom_call.1} parent=1 // pred_check_branch
      %986 = sbr.rel (%p984) target = $region33
    $region32: #{tpu_custom_call.1} parent=1 // pred_region
      %v987 = vld [vmem:[#allocation2] sm:$0xff]
      %v988 = vld [vmem:[#allocation2 + $0x8] sm:$0xff]
      %v989 = vld [vmem:[#allocation2 + $0x10] sm:$0xff]
      %v990 = vld [vmem:[#allocation2 + $0x18] sm:$0xff]
      %991 = vst [vmem:[#allocation9] sm:$0xff] %v987
      %992 = vst [vmem:[#allocation9 + $0x8] sm:$0xff] %v988
      %993 = vst [vmem:[#allocation9 + $0x10] sm:$0xff] %v989
      %994 = vst [vmem:[#allocation9 + $0x18] sm:$0xff] %v990
    $region33: #{tpu_custom_call.1} parent=1 // pred_fallthru
      _
    // Predicated region
    $region34: #{tpu_custom_call.1} parent=1 // pred_check
      _
    $region35: #{tpu_custom_call.1} parent=1 // pred_check_branch
      %996 = sbr.rel (0) target = $region37
    $region36: #{tpu_custom_call.1} parent=1 // pred_region
      %s998 = ssub.s32 512, 512
      %999 = vsyncadd [#allocation5], %s998
      %s1000 = sshll.u32 [#allocation9], 4
      %s1001 = int_to_ptr.vmem [resolvable:$true] %s1000
      %1006 = dma.vmem_to_hbm [thread:$0]  %s1001, 512, %s3, [#allocation5], 128, 128, 8
    $region37: #{tpu_custom_call.1} parent=1 // pred_fallthru
      _
    // Predicated region
    $region38: #{tpu_custom_call.1} parent=1 // pred_check
      _
    $region39: #{tpu_custom_call.1} parent=1 // pred_check_branch
      %1008 = sbr.rel (0) target = $region41
    $region40: #{tpu_custom_call.1} parent=1 // pred_region
      %1009 = dma.done [#allocation5], 512
    $region41: #{tpu_custom_call.1} parent=1 // pred_fallthru
      _
    %1010 = vsyncpa [#allocation4], 1
    %1011 = vsyncpa [#allocation7], 1
    %1012 = vsyncpa [#allocation5], 1

</llo_original>
